<compile_context>
chip_gen: v5e
topology: v5e:2x2
jax: 0.10.0
libtpu: 0.0.40
codegen_flags: <defaults>
</compile_context>

<pallas_src>
import functools

import jax
import jax.numpy as jnp
from jax import lax
from jax.experimental import pallas as pl
from jax.experimental.pallas import tpu as pltpu


# MXU / weight-storage dtype.  jnp.float32 = exact parity with the PyTorch
# reference; jnp.bfloat16 = halve weight bytes + MXU passes (small delta).
MXU_DTYPE = jnp.float32

# 32 GCNConv output widths, exactly matching the PyTorch GCN32 Sequential.
_OUT_DIMS = ([256] * 5 + [128] * 5 + [64] * 5 + [32] * 5 +
             [16] * 5 + [8] * 5 + [4, 4])
_N_TAIL = len(_OUT_DIMS) - 6        # 26 conv layers (7..32), all <=128 wide
_TAIL_STACK = _N_TAIL + 1           # + regression head -> 27 stacked weights

_VMEM = pl.BlockSpec(memory_space=pltpu.MemorySpace.VMEM)
_ANY = pl.BlockSpec(memory_space=pl.ANY)


# ----------------------------- Pallas kernel --------------------------------

def _fused_gcn32_kernel(a_ref, h0_ref, w256_ref, wmid_ref, b256_ref, b128_ref,
                        w128_hbm, o_ref, w128_vmem, tail_sem):
    f32 = jnp.float32

    # Stream the 128-wide tail-weight stack (layers 7..32 + head) HBM -> VMEM
    # immediately; the copy overlaps with the 256-wide front layers below.
    tail_cp = pltpu.make_async_copy(w128_hbm, w128_vmem, tail_sem)
    tail_cp.start()

    a = a_ref[...].astype(MXU_DTYPE)                    # [N, N] adjacency

    # ---- Layer 1: H0 = X @ W1 was computed in the wrapper (real Cin). ----
    x = jnp.maximum(
        jnp.dot(a, h0_ref[...].astype(MXU_DTYPE), preferred_element_type=f32)
        + b256_ref[0:1, :], 0.0)                        # [N, 256] fp32

    # ---- Layers 2-5: 256 -> 256, A_hat @ (X @ W). ----
    for i in range(4):
        w = w256_ref[i]                                 # [256, 256]
        xw = jnp.dot(x.astype(MXU_DTYPE), w, preferred_element_type=f32)
        h = jnp.dot(a, xw.astype(MXU_DTYPE), preferred_element_type=f32)
        x = jnp.maximum(h + b256_ref[i + 1:i + 2, :], 0.0)

    # ---- Layer 6: 256 -> 128. ----
    xw = jnp.dot(x.astype(MXU_DTYPE), wmid_ref[...], preferred_element_type=f32)
    h = jnp.dot(a, xw.astype(MXU_DTYPE), preferred_element_type=f32)
    x = jnp.maximum(h + b128_ref[0:1, :], 0.0)          # [N, 128] fp32

    # ---- Layers 7-32: 26 serially dependent (padded) 128 -> 128 layers. ----
    tail_cp.wait()

    def tail_layer(i, x):
        w = w128_vmem[i]                                # dynamic index [128,128]
        b = b128_ref[pl.ds(i + 1, 1), :]                # [1, 128]
        xw = jnp.dot(x.astype(MXU_DTYPE), w, preferred_element_type=f32)
        h = jnp.dot(a, xw.astype(MXU_DTYPE), preferred_element_type=f32)
        return jnp.maximum(h + b, 0.0)

    x = lax.fori_loop(0, _N_TAIL, tail_layer, x)

    # ---- Regression head (no A_hat, no ReLU), lane-padded output. ----
    o_ref[...] = (jnp.dot(x.astype(MXU_DTYPE), w128_vmem[_TAIL_STACK - 1],
                          preferred_element_type=f32)
                  + b128_ref[_TAIL_STACK:_TAIL_STACK + 1, :])


@functools.partial(jax.jit, static_argnums=3)
def gcn32_forward(x, a_hat, params, out_channels):
    w1, w256, wmid, w128, b256, b128 = params
    n = x.shape[0]
    # Layer-1 feature transform at the real (tiny) fan-in as a plain XLA dot.
    h0 = jnp.dot(x.astype(jnp.float32), w1)             # [N, 256]
    out_pad = pl.pallas_call(
        _fused_gcn32_kernel,
        out_shape=jax.ShapeDtypeStruct((n, 128), jnp.float32),
        in_specs=[_VMEM, _VMEM, _VMEM, _VMEM, _VMEM, _VMEM, _ANY],
        out_specs=_VMEM,
        scratch_shapes=[pltpu.VMEM((_TAIL_STACK, 128, 128), MXU_DTYPE),
                        pltpu.SemaphoreType.DMA],
    )(a_hat, h0, w256, wmid, b256, b128, w128)
    # Drop the zero lane-padding of the head only now.
    return out_pad[:, :out_channels]


# ------------------------------- JAX glue ------------------------------------

def build_norm_adj(edge_index, edge_weight, num_nodes, use_edge_weights):
    """Dense GCN-normalized adjacency with self-loops (PyG gcn_norm semantics)."""
    row = edge_index[0]  # source nodes
    col = edge_index[1]  # target nodes
    if not use_edge_weights or edge_weight is None:
        edge_weight = jnp.ones((row.shape[0],), jnp.float32)
    loop = jnp.arange(num_nodes, dtype=edge_index.dtype)
    row = jnp.concatenate([row, loop])
    col = jnp.concatenate([col, loop])
    ew = jnp.concatenate([edge_weight.astype(jnp.float32),
                          jnp.ones((num_nodes,), jnp.float32)])
    deg = jnp.zeros((num_nodes,), jnp.float32).at[col].add(ew)
    dinv = jnp.where(deg > 0.0, jax.lax.rsqrt(deg), 0.0)
    norm = dinv[row] * ew * dinv[col]
    # out[col] += norm * x[row]  =>  A_hat[col, row] += norm
    a = jnp.zeros((num_nodes, num_nodes), jnp.float32).at[col, row].add(norm)
    return a


def _glorot(key, cin, cout):
    s = (6.0 / (cin + cout)) ** 0.5
    return jax.random.uniform(key, (cin, cout), jnp.float32, -s, s)


def init_params(key, in_channels, out_channels):
    dims = [in_channels] + _OUT_DIMS
    conv_w, conv_b = [], []
    for i in range(len(_OUT_DIMS)):
        key, kw = jax.random.split(key)
        conv_w.append(_glorot(kw, dims[i], dims[i + 1]))
        conv_b.append(jnp.zeros((dims[i + 1],), jnp.float32))  # GCNConv bias = 0

    # Regression head: Linear(4, out_channels), PyTorch default init.
    key, kw, kb = jax.random.split(key, 3)
    fan_in = _OUT_DIMS[-1]
    bound = 1.0 / (fan_in ** 0.5)
    w_head = jax.random.uniform(kw, (fan_in, out_channels), jnp.float32,
                                -bound, bound)
    b_head = jax.random.uniform(kb, (out_channels,), jnp.float32, -bound, bound)

    # ---- Pack into the kernel's stacked / lane-padded layout. ----
    w1 = conv_w[0]                                          # [Cin, 256] (wrapper)
    w256 = jnp.stack(conv_w[1:5]).astype(MXU_DTYPE)         # [4, 256, 256]
    wmid = conv_w[5].astype(MXU_DTYPE)                      # [256, 128]

    tail = []
    for w in conv_w[6:]:                                    # convs 7..32
        tail.append(jnp.zeros((128, 128), jnp.float32)
                    .at[:w.shape[0], :w.shape[1]].set(w))
    tail.append(jnp.zeros((128, 128), jnp.float32)
                .at[:fan_in, :out_channels].set(w_head))    # head
    w128 = jnp.stack(tail).astype(MXU_DTYPE)                # [27, 128, 128]

    b256 = jnp.zeros((5, 256), jnp.float32)
    for i in range(5):
        b256 = b256.at[i, :conv_b[i].shape[0]].set(conv_b[i])
    b128 = jnp.zeros((_TAIL_STACK + 1, 128), jnp.float32)   # [28, 128]
    for i, b in enumerate(conv_b[5:]):                      # convs 6..32 -> rows 0..26
        b128 = b128.at[i, :b.shape[0]].set(b)
    b128 = b128.at[_TAIL_STACK, :out_channels].set(b_head)  # head bias -> row 27

    return (w1, w256, wmid, w128, b256, b128)


# --------------------------------- main --------------------------------------

if __name__ == "__main__":
    N = 64            # number of graph nodes
    E = 256           # number of directed edges
    IN_CHANNELS = 4
    OUT_CHANNELS = 2
    USE_EDGE_WEIGHTS = True

    key = jax.random.PRNGKey(0)
    k_x, k_src, k_dst, k_w, k_param = jax.random.split(key, 5)

    x = jax.random.normal(k_x, (N, IN_CHANNELS), jnp.float32)
    edge_index = jnp.stack([
        jax.random.randint(k_src, (E,), 0, N, dtype=jnp.int32),
        jax.random.randint(k_dst, (E,), 0, N, dtype=jnp.int32),
    ])
    edge_attr = jax.random.uniform(k_w, (E,), jnp.float32, 0.5, 1.5)

    a_hat = build_norm_adj(edge_index, edge_attr, N, USE_EDGE_WEIGHTS)
    params = init_params(k_param, IN_CHANNELS, OUT_CHANNELS)

    out = gcn32_forward(x, a_hat, params, OUT_CHANNELS)
    out = jax.block_until_ready(out)
    assert out.shape == (N, OUT_CHANNELS) and out.dtype == jnp.float32
    assert bool(jnp.all(jnp.isfinite(out)))
    print("KERNEL_OK")
</pallas_src>

<mosaic_0001>
module attributes {stable_mosaic.version = 11 : i64} {
  func.func @_fused_gcn32_kernel(%arg0: memref<64x64xf32, #tpu.memory_space<vmem>>, %arg1: memref<64x256xf32, #tpu.memory_space<vmem>>, %arg2: memref<4x256x256xf32, #tpu.memory_space<vmem>>, %arg3: memref<256x128xf32, #tpu.memory_space<vmem>>, %arg4: memref<5x256xf32, #tpu.memory_space<vmem>>, %arg5: memref<28x128xf32, #tpu.memory_space<vmem>>, %arg6: memref<27x128x128xf32, #tpu.memory_space<any>>, %arg7: memref<64x128xf32, #tpu.memory_space<vmem>>, %arg8: memref<27x128x128xf32, #tpu.memory_space<vmem>>, %arg9: memref<!tpu.dma_semaphore, #tpu.memory_space<semaphore_mem>>) attributes {dimension_semantics = [], scalar_prefetch = 0 : i64, scratch_operands = 2 : i64, tpu.core_type = #tpu.core_type<tc>} {
    tpu.enqueue_dma source(%arg6 : memref<27x128x128xf32, #tpu.memory_space<any>>) target(%arg8 : memref<27x128x128xf32, #tpu.memory_space<vmem>>) target_semaphore(%arg9 : memref<!tpu.dma_semaphore, #tpu.memory_space<semaphore_mem>>)
    %c0 = arith.constant 0 : index
    %c0_0 = arith.constant 0 : index
    %0 = vector.load %arg0[%c0, %c0_0] : memref<64x64xf32, #tpu.memory_space<vmem>>, vector<64x64xf32>
    %c0_1 = arith.constant 0 : index
    %c0_2 = arith.constant 0 : index
    %1 = vector.load %arg1[%c0_1, %c0_2] : memref<64x256xf32, #tpu.memory_space<vmem>>, vector<64x256xf32>
    %cst = arith.constant dense<0.000000e+00> : vector<64x256xf32>
    %2 = tpu.matmul %0, %1, %cst {dimension_numbers = #tpu.dot_dimension_numbers<[1], [0], [0], [1], [0, 0, 1, 1], [], []>} : vector<64x64xf32>, vector<64x256xf32>, vector<64x256xf32> -> vector<64x256xf32>
    %c0_3 = arith.constant 0 : index
    %c0_4 = arith.constant 0 : index
    %3 = vector.load %arg4[%c0_3, %c0_4] : memref<5x256xf32, #tpu.memory_space<vmem>>, vector<1x256xf32>
    %4 = vector.broadcast %3 : vector<1x256xf32> to vector<64x256xf32>
    %5 = arith.addf %2, %4 : vector<64x256xf32>
    %cst_5 = arith.constant 0.000000e+00 : f32
    %6 = vector.broadcast %cst_5 : f32 to vector<64x256xf32>
    %7 = arith.maximumf %5, %6 : vector<64x256xf32>
    %c0_6 = arith.constant 0 : index
    %c0_7 = arith.constant 0 : index
    %c0_8 = arith.constant 0 : index
    %8 = vector.load %arg2[%c0_6, %c0_7, %c0_8] : memref<4x256x256xf32, #tpu.memory_space<vmem>>, vector<1x256x256xf32>
    %9 = vector.shape_cast %8 : vector<1x256x256xf32> to vector<256x256xf32>
    %cst_9 = arith.constant dense<0.000000e+00> : vector<64x256xf32>
    %10 = tpu.matmul %7, %9, %cst_9 {dimension_numbers = #tpu.dot_dimension_numbers<[1], [0], [0], [1], [0, 0, 1, 1], [], []>} : vector<64x256xf32>, vector<256x256xf32>, vector<64x256xf32> -> vector<64x256xf32>
    %cst_10 = arith.constant dense<0.000000e+00> : vector<64x256xf32>
    %11 = tpu.matmul %0, %10, %cst_10 {dimension_numbers = #tpu.dot_dimension_numbers<[1], [0], [0], [1], [0, 0, 1, 1], [], []>} : vector<64x64xf32>, vector<64x256xf32>, vector<64x256xf32> -> vector<64x256xf32>
    %c1 = arith.constant 1 : index
    %c0_11 = arith.constant 0 : index
    %12 = vector.load %arg4[%c1, %c0_11] : memref<5x256xf32, #tpu.memory_space<vmem>>, vector<1x256xf32>
    %13 = vector.broadcast %12 : vector<1x256xf32> to vector<64x256xf32>
    %14 = arith.addf %11, %13 : vector<64x256xf32>
    %cst_12 = arith.constant 0.000000e+00 : f32
    %15 = vector.broadcast %cst_12 : f32 to vector<64x256xf32>
    %16 = arith.maximumf %14, %15 : vector<64x256xf32>
    %c1_13 = arith.constant 1 : index
    %c0_14 = arith.constant 0 : index
    %c0_15 = arith.constant 0 : index
    %17 = vector.load %arg2[%c1_13, %c0_14, %c0_15] : memref<4x256x256xf32, #tpu.memory_space<vmem>>, vector<1x256x256xf32>
    %18 = vector.shape_cast %17 : vector<1x256x256xf32> to vector<256x256xf32>
    %cst_16 = arith.constant dense<0.000000e+00> : vector<64x256xf32>
    %19 = tpu.matmul %16, %18, %cst_16 {dimension_numbers = #tpu.dot_dimension_numbers<[1], [0], [0], [1], [0, 0, 1, 1], [], []>} : vector<64x256xf32>, vector<256x256xf32>, vector<64x256xf32> -> vector<64x256xf32>
    %cst_17 = arith.constant dense<0.000000e+00> : vector<64x256xf32>
    %20 = tpu.matmul %0, %19, %cst_17 {dimension_numbers = #tpu.dot_dimension_numbers<[1], [0], [0], [1], [0, 0, 1, 1], [], []>} : vector<64x64xf32>, vector<64x256xf32>, vector<64x256xf32> -> vector<64x256xf32>
    %c2 = arith.constant 2 : index
    %c0_18 = arith.constant 0 : index
    %21 = vector.load %arg4[%c2, %c0_18] : memref<5x256xf32, #tpu.memory_space<vmem>>, vector<1x256xf32>
    %22 = vector.broadcast %21 : vector<1x256xf32> to vector<64x256xf32>
    %23 = arith.addf %20, %22 : vector<64x256xf32>
    %cst_19 = arith.constant 0.000000e+00 : f32
    %24 = vector.broadcast %cst_19 : f32 to vector<64x256xf32>
    %25 = arith.maximumf %23, %24 : vector<64x256xf32>
    %c2_20 = arith.constant 2 : index
    %c0_21 = arith.constant 0 : index
    %c0_22 = arith.constant 0 : index
    %26 = vector.load %arg2[%c2_20, %c0_21, %c0_22] : memref<4x256x256xf32, #tpu.memory_space<vmem>>, vector<1x256x256xf32>
    %27 = vector.shape_cast %26 : vector<1x256x256xf32> to vector<256x256xf32>
    %cst_23 = arith.constant dense<0.000000e+00> : vector<64x256xf32>
    %28 = tpu.matmul %25, %27, %cst_23 {dimension_numbers = #tpu.dot_dimension_numbers<[1], [0], [0], [1], [0, 0, 1, 1], [], []>} : vector<64x256xf32>, vector<256x256xf32>, vector<64x256xf32> -> vector<64x256xf32>
    %cst_24 = arith.constant dense<0.000000e+00> : vector<64x256xf32>
    %29 = tpu.matmul %0, %28, %cst_24 {dimension_numbers = #tpu.dot_dimension_numbers<[1], [0], [0], [1], [0, 0, 1, 1], [], []>} : vector<64x64xf32>, vector<64x256xf32>, vector<64x256xf32> -> vector<64x256xf32>
    %c3 = arith.constant 3 : index
    %c0_25 = arith.constant 0 : index
    %30 = vector.load %arg4[%c3, %c0_25] : memref<5x256xf32, #tpu.memory_space<vmem>>, vector<1x256xf32>
    %31 = vector.broadcast %30 : vector<1x256xf32> to vector<64x256xf32>
    %32 = arith.addf %29, %31 : vector<64x256xf32>
    %cst_26 = arith.constant 0.000000e+00 : f32
    %33 = vector.broadcast %cst_26 : f32 to vector<64x256xf32>
    %34 = arith.maximumf %32, %33 : vector<64x256xf32>
    %c3_27 = arith.constant 3 : index
    %c0_28 = arith.constant 0 : index
    %c0_29 = arith.constant 0 : index
    %35 = vector.load %arg2[%c3_27, %c0_28, %c0_29] : memref<4x256x256xf32, #tpu.memory_space<vmem>>, vector<1x256x256xf32>
    %36 = vector.shape_cast %35 : vector<1x256x256xf32> to vector<256x256xf32>
    %cst_30 = arith.constant dense<0.000000e+00> : vector<64x256xf32>
    %37 = tpu.matmul %34, %36, %cst_30 {dimension_numbers = #tpu.dot_dimension_numbers<[1], [0], [0], [1], [0, 0, 1, 1], [], []>} : vector<64x256xf32>, vector<256x256xf32>, vector<64x256xf32> -> vector<64x256xf32>
    %cst_31 = arith.constant dense<0.000000e+00> : vector<64x256xf32>
    %38 = tpu.matmul %0, %37, %cst_31 {dimension_numbers = #tpu.dot_dimension_numbers<[1], [0], [0], [1], [0, 0, 1, 1], [], []>} : vector<64x64xf32>, vector<64x256xf32>, vector<64x256xf32> -> vector<64x256xf32>
    %c4 = arith.constant 4 : index
    %c0_32 = arith.constant 0 : index
    %39 = vector.load %arg4[%c4, %c0_32] : memref<5x256xf32, #tpu.memory_space<vmem>>, vector<1x256xf32>
    %40 = vector.broadcast %39 : vector<1x256xf32> to vector<64x256xf32>
    %41 = arith.addf %38, %40 : vector<64x256xf32>
    %cst_33 = arith.constant 0.000000e+00 : f32
    %42 = vector.broadcast %cst_33 : f32 to vector<64x256xf32>
    %43 = arith.maximumf %41, %42 : vector<64x256xf32>
    %c0_34 = arith.constant 0 : index
    %c0_35 = arith.constant 0 : index
    %44 = vector.load %arg3[%c0_34, %c0_35] : memref<256x128xf32, #tpu.memory_space<vmem>>, vector<256x128xf32>
    %cst_36 = arith.constant dense<0.000000e+00> : vector<64x128xf32>
    %45 = tpu.matmul %43, %44, %cst_36 {dimension_numbers = #tpu.dot_dimension_numbers<[1], [0], [0], [1], [0, 0, 1, 1], [], []>} : vector<64x256xf32>, vector<256x128xf32>, vector<64x128xf32> -> vector<64x128xf32>
    %cst_37 = arith.constant dense<0.000000e+00> : vector<64x128xf32>
    %46 = tpu.matmul %0, %45, %cst_37 {dimension_numbers = #tpu.dot_dimension_numbers<[1], [0], [0], [1], [0, 0, 1, 1], [], []>} : vector<64x64xf32>, vector<64x128xf32>, vector<64x128xf32> -> vector<64x128xf32>
    %c0_38 = arith.constant 0 : index
    %c0_39 = arith.constant 0 : index
    %47 = vector.load %arg5[%c0_38, %c0_39] : memref<28x128xf32, #tpu.memory_space<vmem>>, vector<1x128xf32>
    %48 = vector.broadcast %47 : vector<1x128xf32> to vector<64x128xf32>
    %49 = arith.addf %46, %48 : vector<64x128xf32>
    %cst_40 = arith.constant 0.000000e+00 : f32
    %50 = vector.broadcast %cst_40 : f32 to vector<64x128xf32>
    %51 = arith.maximumf %49, %50 : vector<64x128xf32>
    tpu.wait_dma2 semaphore(%arg9 : memref<!tpu.dma_semaphore, #tpu.memory_space<semaphore_mem>>) src(%arg6 : memref<27x128x128xf32, #tpu.memory_space<any>>) dst(%arg8 : memref<27x128x128xf32, #tpu.memory_space<vmem>>)
    %c0_i32 = arith.constant 0 : i32
    %c26_i32 = arith.constant 26 : i32
    %52 = arith.addi %c0_i32, %c26_i32 : i32
    %c1_i32 = arith.constant 1 : i32
    %53 = scf.for %arg10 = %c0_i32 to %52 step %c1_i32 iter_args(%arg11 = %51) -> (vector<64x128xf32>)  : i32 {
      %61 = arith.index_cast %arg10 : i32 to index
      %c0_48 = arith.constant 0 : index
      %c0_49 = arith.constant 0 : index
      %62 = vector.load %arg8[%61, %c0_48, %c0_49] : memref<27x128x128xf32, #tpu.memory_space<vmem>>, vector<1x128x128xf32>
      %63 = vector.shape_cast %62 : vector<1x128x128xf32> to vector<128x128xf32>
      %c1_i32_50 = arith.constant 1 : i32
      %64 = arith.addi %arg10, %c1_i32_50 : i32
      %65 = arith.index_cast %64 : i32 to index
      %c0_51 = arith.constant 0 : index
      %66 = vector.load %arg5[%65, %c0_51] : memref<28x128xf32, #tpu.memory_space<vmem>>, vector<1x128xf32>
      %cst_52 = arith.constant dense<0.000000e+00> : vector<64x128xf32>
      %67 = tpu.matmul %arg11, %63, %cst_52 {dimension_numbers = #tpu.dot_dimension_numbers<[1], [0], [0], [1], [0, 0, 1, 1], [], []>} : vector<64x128xf32>, vector<128x128xf32>, vector<64x128xf32> -> vector<64x128xf32>
      %cst_53 = arith.constant dense<0.000000e+00> : vector<64x128xf32>
      %68 = tpu.matmul %0, %67, %cst_53 {dimension_numbers = #tpu.dot_dimension_numbers<[1], [0], [0], [1], [0, 0, 1, 1], [], []>} : vector<64x64xf32>, vector<64x128xf32>, vector<64x128xf32> -> vector<64x128xf32>
      %69 = vector.broadcast %66 : vector<1x128xf32> to vector<64x128xf32>
      %70 = arith.addf %68, %69 : vector<64x128xf32>
      %cst_54 = arith.constant 0.000000e+00 : f32
      %71 = vector.broadcast %cst_54 : f32 to vector<64x128xf32>
      %72 = arith.maximumf %70, %71 : vector<64x128xf32>
      scf.yield %72 : vector<64x128xf32>
    }
    %c26_i32_41 = arith.constant 26 : i32
    %c26 = arith.constant 26 : index
    %c0_42 = arith.constant 0 : index
    %c0_43 = arith.constant 0 : index
    %54 = vector.load %arg8[%c26, %c0_42, %c0_43] : memref<27x128x128xf32, #tpu.memory_space<vmem>>, vector<1x128x128xf32>
    %55 = vector.shape_cast %54 : vector<1x128x128xf32> to vector<128x128xf32>
    %cst_44 = arith.constant dense<0.000000e+00> : vector<64x128xf32>
    %56 = tpu.matmul %53, %55, %cst_44 {dimension_numbers = #tpu.dot_dimension_numbers<[1], [0], [0], [1], [0, 0, 1, 1], [], []>} : vector<64x128xf32>, vector<128x128xf32>, vector<64x128xf32> -> vector<64x128xf32>
    %c27 = arith.constant 27 : index
    %c0_45 = arith.constant 0 : index
    %57 = vector.load %arg5[%c27, %c0_45] : memref<28x128xf32, #tpu.memory_space<vmem>>, vector<1x128xf32>
    %58 = vector.broadcast %57 : vector<1x128xf32> to vector<64x128xf32>
    %59 = arith.addf %56, %58 : vector<64x128xf32>
    %c0_46 = arith.constant 0 : index
    %c0_47 = arith.constant 0 : index
    %60 = vector.load %arg7[%c0_46, %c0_47] : memref<64x128xf32, #tpu.memory_space<vmem>>, vector<64x128xf32>
    tpu.vector_store %arg7[%c0_46, %c0_47], %59 {strides = array<i32>} : memref<64x128xf32, #tpu.memory_space<vmem>>, vector<64x128xf32>,
    return
  }
}

</mosaic_0001>

<llo_original>
// kernel: gcn32_forward.1
$region0: #{gcn32_forward.1}
  #allocation0 [shape = 'u32[]', space=smem, size = 0x4, offset = 0x4, fixed_abs, tag = 'smem constant byte address 0x4 - core index']
  #allocation1 [shape = 'u32[72,128]{1,0:T(1,128)}', space=vmem, size = 0x9000, scoped, tag = 'internal scratch']
  #allocation2 [shape = 'f32[27,128,128]{2,1,0:T(8,128)}', space=vmem, size = 0x1b0000, scoped, tag = 'scratch operand']
  #allocation3 [shape = 's32[1]{0}', space=sflag, size = 0x4, scoped, tag = 'scratch operand']
  #allocation12 [shape = 's32[]', space=sflag, size = 0x4, offset = 0, fixed_abs, tag = 'sflag constant byte address 0x0 - dummy sync flag']
  #allocation13 [shape = 's32[]', space=sflag, size = 0x4, offset = 0, fixed_abs, tag = 'sflag constant byte address 0x0 - dummy sync flag']
  #allocation14 [shape = 'u32[]', space=smem, size = 0x4, offset = 0x44, fixed_abs, tag = 'smem constant byte address 0x44 - assertion arg 0']
  #allocation15 [shape = 'u32[]', space=smem, size = 0x4, offset = 0x48, fixed_abs, tag = 'smem constant byte address 0x48 - assertion arg 1']
  %s0 = inlined_call_operand.hbm [shape: f32[64,64], index: 0, kind: input, shape index: {}]
  %s1 = inlined_call_operand.vmem [shape: f32[64,256], index: 1, kind: input, shape index: {}]
  %s2 = inlined_call_operand.hbm [shape: f32[4,256,256], index: 2, kind: input, shape index: {}]
  %s3 = inlined_call_operand.hbm [shape: f32[256,128], index: 3, kind: input, shape index: {}]
  %s4 = inlined_call_operand.hbm [shape: f32[5,256], index: 4, kind: input, shape index: {}]
  %s5 = inlined_call_operand.hbm [shape: f32[28,128], index: 5, kind: input, shape index: {}]
  %s6 = inlined_call_operand.hbm [shape: f32[27,128,128], index: 6, kind: input, shape index: {}]
  %s7 = inlined_call_operand.vmem [shape: f32[64,128], index: 7, kind: output, shape index: {}]
  %s8 = sld [smem:[#allocation0]]
  $region65: #{gcn32_forward.1} parent=0
    _
  %s10 = ssub.s32 1, %s8
  %s11 = scalar_select 0, %s10, %s8
  $region1: #{gcn32_forward.1} parent=0
    #allocation4 [shape = 'u8[32768]{0}', space=vmem, size = 0x8000, scoped, tag = 'input window, operand 0, single buffered']
    #allocation5 [shape = 's32[1]{0}', space=sflag, size = 0x4, scoped, tag = 'scoped memory for gcn32_forward.1']
    #allocation6 [shape = 'u8[1048576]{0}', space=vmem, size = 0x100000, scoped, tag = 'input window, operand 2, single buffered']
    #allocation7 [shape = 's32[1]{0}', space=sflag, size = 0x4, scoped, tag = 'scoped memory for gcn32_forward.1']
    #allocation8 [shape = 'u8[131072]{0}', space=vmem, size = 0x20000, scoped, tag = 'input window, operand 3, single buffered']
    #allocation9 [shape = 'u8[8192]{0}', space=vmem, size = 0x2000, scoped, tag = 'input window, operand 4, single buffered']
    #allocation10 [shape = 's32[1]{0}', space=sflag, size = 0x4, scoped, tag = 'scoped memory for gcn32_forward.1']
    #allocation11 [shape = 'u8[16384]{0}', space=vmem, size = 0x4000, scoped, tag = 'input window, operand 5, single buffered']
    %12 = vsyncpa [#allocation5], 0
    %13 = vsyncpa [#allocation7], 0
    %14 = vsyncpa [#allocation10], 0
    // Predicated region
    $region2: #{gcn32_forward.1} parent=1 // pred_check
      _
    $region3: #{gcn32_forward.1} parent=1 // pred_check_branch
      %16 = sbr.rel (0) target = $region5
    $region4: #{gcn32_forward.1} parent=1 // pred_region
      %18 = vsyncadd [#allocation5], 0
      %s19 = sshll.u32 %s0, 4
      %s20 = int_to_ptr.hbm [resolvable:$true] %s19
      %s21 = sshll.u32 [#allocation4], 4
      %s22 = int_to_ptr.vmem [resolvable:$true] %s21
      %27 = dma.hbm_to_vmem [thread:$0]  %s20, 1024, %s22, [#allocation5], 128, 128, 8
    $region5: #{gcn32_forward.1} parent=1 // pred_fallthru
      _
    // Predicated region
    $region6: #{gcn32_forward.1} parent=1 // pred_check
      _
    $region7: #{gcn32_forward.1} parent=1 // pred_check_branch
      %29 = sbr.rel (0) target = $region9
    $region8: #{gcn32_forward.1} parent=1 // pred_region
      _
    $region9: #{gcn32_forward.1} parent=1 // pred_fallthru
      _
    // Predicated region
    $region10: #{gcn32_forward.1} parent=1 // pred_check
      _
    $region11: #{gcn32_forward.1} parent=1 // pred_check_branch
      %31 = sbr.rel (0) target = $region13
    $region12: #{gcn32_forward.1} parent=1 // pred_region
      %33 = vsyncadd [#allocation7], 0
      %s34 = sshll.u32 %s2, 4
      %s35 = int_to_ptr.hbm [resolvable:$true] %s34
      %s36 = sshll.u32 [#allocation6], 4
      %s37 = int_to_ptr.vmem [resolvable:$true] %s36
      %42 = dma.hbm_to_vmem [thread:$0]  %s35, 32768, %s37, [#allocation7], 256, 256, 16
    $region13: #{gcn32_forward.1} parent=1 // pred_fallthru
      _
    // Predicated region
    $region14: #{gcn32_forward.1} parent=1 // pred_check
      _
    $region15: #{gcn32_forward.1} parent=1 // pred_check_branch
      %44 = sbr.rel (0) target = $region17
    $region16: #{gcn32_forward.1} parent=1 // pred_region
      %46 = vsyncadd [#allocation7], 0
      %s47 = sshll.u32 %s3, 4
      %s48 = int_to_ptr.hbm [resolvable:$true] %s47
      %s49 = sshll.u32 [#allocation8], 4
      %s50 = int_to_ptr.vmem [resolvable:$true] %s49
      %55 = dma.hbm_to_vmem [thread:$0]  %s48, 4096, %s50, [#allocation7], 128, 128, 8
    $region17: #{gcn32_forward.1} parent=1 // pred_fallthru
      _
    // Predicated region
    $region18: #{gcn32_forward.1} parent=1 // pred_check
      _
    $region19: #{gcn32_forward.1} parent=1 // pred_check_branch
      %57 = sbr.rel (0) target = $region21
    $region20: #{gcn32_forward.1} parent=1 // pred_region
      %59 = vsyncadd [#allocation10], 0
      %s61 = sshll.u32 %s4, 4
      %s62 = int_to_ptr.hbm [resolvable:$true] %s61
      %s63 = sshll.u32 [#allocation9], 4
      %s64 = int_to_ptr.vmem [resolvable:$true] %s63
      %66 = dma.hbm_to_vmem [thread:$0]  %s62, 256, %s64, [#allocation10]
    $region21: #{gcn32_forward.1} parent=1 // pred_fallthru
      _
    // Predicated region
    $region22: #{gcn32_forward.1} parent=1 // pred_check
      _
    $region23: #{gcn32_forward.1} parent=1 // pred_check_branch
      %68 = sbr.rel (0) target = $region25
    $region24: #{gcn32_forward.1} parent=1 // pred_region
      %70 = vsyncadd [#allocation10], 0
      %s71 = sshll.u32 %s5, 4
      %s72 = int_to_ptr.hbm [resolvable:$true] %s71
      %s73 = sshll.u32 [#allocation11], 4
      %s74 = int_to_ptr.vmem [resolvable:$true] %s73
      %79 = dma.hbm_to_vmem [thread:$0]  %s72, 512, %s74, [#allocation10], 128, 128, 8
    $region25: #{gcn32_forward.1} parent=1 // pred_fallthru
      _
    // Predicated region
    $region26: #{gcn32_forward.1} parent=1 // pred_check
      _
    $region27: #{gcn32_forward.1} parent=1 // pred_check_branch
      %81 = sbr.rel (0) target = $region29
    $region28: #{gcn32_forward.1} parent=1 // pred_region
      %83 = dma.done [#allocation5], 1024
    $region29: #{gcn32_forward.1} parent=1 // pred_fallthru
      _
    // Predicated region
    $region30: #{gcn32_forward.1} parent=1 // pred_check
      _
    $region31: #{gcn32_forward.1} parent=1 // pred_check_branch
      %85 = sbr.rel (0) target = $region33
    $region32: #{gcn32_forward.1} parent=1 // pred_region
      %87 = dma.done [#allocation7], 32768
    $region33: #{gcn32_forward.1} parent=1 // pred_fallthru
      _
    // Predicated region
    $region34: #{gcn32_forward.1} parent=1 // pred_check
      _
    $region35: #{gcn32_forward.1} parent=1 // pred_check_branch
      %89 = sbr.rel (0) target = $region37
    $region36: #{gcn32_forward.1} parent=1 // pred_region
      %91 = dma.done [#allocation7], 4096
    $region37: #{gcn32_forward.1} parent=1 // pred_fallthru
      _
    // Predicated region
    $region38: #{gcn32_forward.1} parent=1 // pred_check
      _
    $region39: #{gcn32_forward.1} parent=1 // pred_check_branch
      %93 = sbr.rel (0) target = $region41
    $region40: #{gcn32_forward.1} parent=1 // pred_region
      %95 = dma.done [#allocation10], 256
    $region41: #{gcn32_forward.1} parent=1 // pred_fallthru
      _
    // Predicated region
    $region42: #{gcn32_forward.1} parent=1 // pred_check
      _
    $region43: #{gcn32_forward.1} parent=1 // pred_check_branch
      %97 = sbr.rel (0) target = $region45
    $region44: #{gcn32_forward.1} parent=1 // pred_region
      %99 = dma.done [#allocation10], 512
    $region45: #{gcn32_forward.1} parent=1 // pred_fallthru
      _
    // Predicated region
    $region46: #{gcn32_forward.1} parent=1 // pred_check
      _
    $region47: #{gcn32_forward.1} parent=1 // pred_check_branch
      %101 = sbr.rel target = $region49
    $region48: #{gcn32_forward.1} parent=1 // pred_region
      %102 = sst [smem:[#allocation14]] [#allocation13]
      %103 = sst [smem:[#allocation15]] [#allocation12]
    $region49: #{gcn32_forward.1} parent=1 // pred_fallthru
      _
    %105 = shalt.err (0)
    %s107 = sshll.u32 %s6, 4
    %s108 = int_to_ptr.hbm [resolvable:$true] %s107
    %s109 = sshll.u32 [#allocation2], 4
    %s110 = int_to_ptr.vmem [resolvable:$true] %s109
    %112 = dma.hbm_to_vmem [thread:$0]  %s108, 55296, %s110, [#allocation3]
    %v113 = vld [vmem:[#allocation4] sm:$0xff]
    %v114 = vld [vmem:[#allocation4 + $0x8] sm:$0xff]
    %v115 = vld [vmem:[#allocation4 + $0x10] sm:$0xff]
    %v116 = vld [vmem:[#allocation4 + $0x18] sm:$0xff]
    %v117 = vld [vmem:[#allocation4 + $0x20] sm:$0xff]
    %v118 = vld [vmem:[#allocation4 + $0x28] sm:$0xff]
    %v119 = vld [vmem:[#allocation4 + $0x30] sm:$0xff]
    %v120 = vld [vmem:[#allocation4 + $0x38] sm:$0xff]
    %v121 = vld [vmem:[%s1] sm:$0xff]
    %v122 = vld [vmem:[%s1 + $0x8] sm:$0xff]
    %v123 = vld [vmem:[%s1 + $0x10] sm:$0xff]
    %v124 = vld [vmem:[%s1 + $0x18] sm:$0xff]
    %v125 = vld [vmem:[%s1 + $0x20] sm:$0xff]
    %v126 = vld [vmem:[%s1 + $0x28] sm:$0xff]
    %v127 = vld [vmem:[%s1 + $0x30] sm:$0xff]
    %v128 = vld [vmem:[%s1 + $0x38] sm:$0xff]
    %v129 = vld [vmem:[%s1 + $0x40] sm:$0xff]
    %v130 = vld [vmem:[%s1 + $0x48] sm:$0xff]
    %v131 = vld [vmem:[%s1 + $0x50] sm:$0xff]
    %v132 = vld [vmem:[%s1 + $0x58] sm:$0xff]
    %v133 = vld [vmem:[%s1 + $0x60] sm:$0xff]
    %v134 = vld [vmem:[%s1 + $0x68] sm:$0xff]
    %v135 = vld [vmem:[%s1 + $0x70] sm:$0xff]
    %v136 = vld [vmem:[%s1 + $0x78] sm:$0xff]
    %v137 = vld [vmem:[#allocation9] ss:$8 sm:$0x3]
    %v139 = vperm.slane %v137, 0
    %v140 = vperm.slane %v137, 1
    %vm143 = vcmask 523264
    %v145 = vsel %vm143, %v113, 0
    %v148 = vsel %vm143, %v114, 0
    %v151 = vsel %vm143, %v115, 0
    %v154 = vsel %vm143, %v116, 0
    %v157 = vsel %vm143, %v117, 0
    %v160 = vsel %vm143, %v118, 0
    %v163 = vsel %vm143, %v119, 0
    %v166 = vsel %vm143, %v120, 0
    %168 = vmatpush.msra.mxu0 0.0
    %169 = vmatpush.msra.mxu0 0.0
    %170 = vmatpush.msra.mxu0 0.0
    %171 = vmatpush.msra.mxu0 0.0
    %172 = vmatpush.msra.mxu0 0.0
    %173 = vmatpush.msra.mxu0 0.0
    %174 = vmatpush.msra.mxu0 0.0
    %175 = vmatpush.msra.mxu0 0.0
    %176 = vmatpush.msra.mxu0 %v135
    %177 = vmatpush.msra.mxu0 %v133
    %178 = vmatpush.msra.mxu0 %v131
    %179 = vmatpush.msra.mxu0 %v129
    %180 = vmatpush.msra.mxu0 %v127
    %181 = vmatpush.msra.mxu0 %v125
    %182 = vmatpush.msra.mxu0 %v123
    %183 = vmatpush.msra.mxu0 %v121
    %184 = vmatmul.f32.gmra.mxu0 %v145
    %v185 = vpop.f32.mrf.mxu0
    %v186 = vadd.f32 %v139, %v185
    %187 = vmatmul.f32.gmra.mxu0 %v148
    %v188 = vpop.f32.mrf.mxu0
    %v189 = vadd.f32 %v139, %v188
    %190 = vmatmul.f32.gmra.mxu0 %v151
    %v191 = vpop.f32.mrf.mxu0
    %v192 = vadd.f32 %v139, %v191
    %193 = vmatmul.f32.gmra.mxu0 %v154
    %v194 = vpop.f32.mrf.mxu0
    %v195 = vadd.f32 %v139, %v194
    %196 = vmatmul.f32.gmra.mxu0 %v157
    %v197 = vpop.f32.mrf.mxu0
    %v198 = vadd.f32 %v139, %v197
    %199 = vmatmul.f32.gmra.mxu0 %v160
    %v200 = vpop.f32.mrf.mxu0
    %v201 = vadd.f32 %v139, %v200
    %202 = vmatmul.f32.gmra.mxu0 %v163
    %v203 = vpop.f32.mrf.mxu0
    %v204 = vadd.f32 %v139, %v203
    %205 = vmatmul.f32.gmra.mxu0 %v166
    %v206 = vpop.f32.mrf.mxu0
    %v207 = vadd.f32 %v139, %v206
    %208 = vdwg.mxu0
    %209 = vmatpush.msra.mxu0 0.0
    %210 = vmatpush.msra.mxu0 0.0
    %211 = vmatpush.msra.mxu0 0.0
    %212 = vmatpush.msra.mxu0 0.0
    %213 = vmatpush.msra.mxu0 0.0
    %214 = vmatpush.msra.mxu0 0.0
    %215 = vmatpush.msra.mxu0 0.0
    %216 = vmatpush.msra.mxu0 0.0
    %217 = vmatpush.msra.mxu0 %v136
    %218 = vmatpush.msra.mxu0 %v134
    %219 = vmatpush.msra.mxu0 %v132
    %220 = vmatpush.msra.mxu0 %v130
    %221 = vmatpush.msra.mxu0 %v128
    %222 = vmatpush.msra.mxu0 %v126
    %223 = vmatpush.msra.mxu0 %v124
    %224 = vmatpush.msra.mxu0 %v122
    %225 = vmatmul.f32.gmra.mxu0 %v145
    %v226 = vpop.f32.mrf.mxu0
    %v227 = vadd.f32 %v140, %v226
    %228 = vmatmul.f32.gmra.mxu0 %v148
    %v229 = vpop.f32.mrf.mxu0
    %v230 = vadd.f32 %v140, %v229
    %231 = vmatmul.f32.gmra.mxu0 %v151
    %v232 = vpop.f32.mrf.mxu0
    %v233 = vadd.f32 %v140, %v232
    %234 = vmatmul.f32.gmra.mxu0 %v154
    %v235 = vpop.f32.mrf.mxu0
    %v236 = vadd.f32 %v140, %v235
    %237 = vmatmul.f32.gmra.mxu0 %v157
    %v238 = vpop.f32.mrf.mxu0
    %v239 = vadd.f32 %v140, %v238
    %240 = vmatmul.f32.gmra.mxu0 %v160
    %v241 = vpop.f32.mrf.mxu0
    %v242 = vadd.f32 %v140, %v241
    %243 = vmatmul.f32.gmra.mxu0 %v163
    %v244 = vpop.f32.mrf.mxu0
    %v245 = vadd.f32 %v140, %v244
    %246 = vmatmul.f32.gmra.mxu0 %v166
    %v247 = vpop.f32.mrf.mxu0
    %v248 = vadd.f32 %v140, %v247
    %249 = vdwg.mxu0
    %v250 = vmax.f32 %v186, 0.0
    %v251 = vmax.f32 %v227, 0.0
    %v252 = vmax.f32 %v189, 0.0
    %v253 = vmax.f32 %v230, 0.0
    %v254 = vmax.f32 %v192, 0.0
    %v255 = vmax.f32 %v233, 0.0
    %v256 = vmax.f32 %v195, 0.0
    %v257 = vmax.f32 %v236, 0.0
    %v258 = vmax.f32 %v198, 0.0
    %v259 = vmax.f32 %v239, 0.0
    %v260 = vmax.f32 %v201, 0.0
    %v261 = vmax.f32 %v242, 0.0
    %v262 = vmax.f32 %v204, 0.0
    %v263 = vmax.f32 %v245, 0.0
    %v264 = vmax.f32 %v207, 0.0
    %v265 = vmax.f32 %v248, 0.0
    %v266 = vld [vmem:[#allocation6] sm:$0xff]
    %v267 = vld [vmem:[#allocation6 + $0x8] sm:$0xff]
    %v268 = vld [vmem:[#allocation6 + $0x10] sm:$0xff]
    %v269 = vld [vmem:[#allocation6 + $0x18] sm:$0xff]
    %v270 = vld [vmem:[#allocation6 + $0x20] sm:$0xff]
    %v271 = vld [vmem:[#allocation6 + $0x28] sm:$0xff]
    %v272 = vld [vmem:[#allocation6 + $0x30] sm:$0xff]
    %v273 = vld [vmem:[#allocation6 + $0x38] sm:$0xff]
    %v274 = vld [vmem:[#allocation6 + $0x40] sm:$0xff]
    %v275 = vld [vmem:[#allocation6 + $0x48] sm:$0xff]
    %v276 = vld [vmem:[#allocation6 + $0x50] sm:$0xff]
    %v277 = vld [vmem:[#allocation6 + $0x58] sm:$0xff]
    %v278 = vld [vmem:[#allocation6 + $0x60] sm:$0xff]
    %v279 = vld [vmem:[#allocation6 + $0x68] sm:$0xff]
    %v280 = vld [vmem:[#allocation6 + $0x70] sm:$0xff]
    %v281 = vld [vmem:[#allocation6 + $0x78] sm:$0xff]
    %v282 = vld [vmem:[#allocation6 + $0x80] sm:$0xff]
    %v283 = vld [vmem:[#allocation6 + $0x88] sm:$0xff]
    %v284 = vld [vmem:[#allocation6 + $0x90] sm:$0xff]
    %v285 = vld [vmem:[#allocation6 + $0x98] sm:$0xff]
    %v286 = vld [vmem:[#allocation6 + $0xa0] sm:$0xff]
    %v287 = vld [vmem:[#allocation6 + $0xa8] sm:$0xff]
    %v288 = vld [vmem:[#allocation6 + $0xb0] sm:$0xff]
    %v289 = vld [vmem:[#allocation6 + $0xb8] sm:$0xff]
    %v290 = vld [vmem:[#allocation6 + $0xc0] sm:$0xff]
    %v291 = vld [vmem:[#allocation6 + $0xc8] sm:$0xff]
    %v292 = vld [vmem:[#allocation6 + $0xd0] sm:$0xff]
    %v293 = vld [vmem:[#allocation6 + $0xd8] sm:$0xff]
    %v294 = vld [vmem:[#allocation6 + $0xe0] sm:$0xff]
    %v295 = vld [vmem:[#allocation6 + $0xe8] sm:$0xff]
    %v296 = vld [vmem:[#allocation6 + $0xf0] sm:$0xff]
    %v297 = vld [vmem:[#allocation6 + $0xf8] sm:$0xff]
    %v298 = vld [vmem:[#allocation6 + $0x100] sm:$0xff]
    %v299 = vld [vmem:[#allocation6 + $0x108] sm:$0xff]
    %v300 = vld [vmem:[#allocation6 + $0x110] sm:$0xff]
    %v301 = vld [vmem:[#allocation6 + $0x118] sm:$0xff]
    %v302 = vld [vmem:[#allocation6 + $0x120] sm:$0xff]
    %v303 = vld [vmem:[#allocation6 + $0x128] sm:$0xff]
    %v304 = vld [vmem:[#allocation6 + $0x130] sm:$0xff]
    %v305 = vld [vmem:[#allocation6 + $0x138] sm:$0xff]
    %v306 = vld [vmem:[#allocation6 + $0x140] sm:$0xff]
    %v307 = vld [vmem:[#allocation6 + $0x148] sm:$0xff]
    %v308 = vld [vmem:[#allocation6 + $0x150] sm:$0xff]
    %v309 = vld [vmem:[#allocation6 + $0x158] sm:$0xff]
    %v310 = vld [vmem:[#allocation6 + $0x160] sm:$0xff]
    %v311 = vld [vmem:[#allocation6 + $0x168] sm:$0xff]
    %v312 = vld [vmem:[#allocation6 + $0x170] sm:$0xff]
    %v313 = vld [vmem:[#allocation6 + $0x178] sm:$0xff]
    %v314 = vld [vmem:[#allocation6 + $0x180] sm:$0xff]
    %v315 = vld [vmem:[#allocation6 + $0x188] sm:$0xff]
    %v316 = vld [vmem:[#allocation6 + $0x190] sm:$0xff]
    %v317 = vld [vmem:[#allocation6 + $0x198] sm:$0xff]
    %v318 = vld [vmem:[#allocation6 + $0x1a0] sm:$0xff]
    %v319 = vld [vmem:[#allocation6 + $0x1a8] sm:$0xff]
    %v320 = vld [vmem:[#allocation6 + $0x1b0] sm:$0xff]
    %v321 = vld [vmem:[#allocation6 + $0x1b8] sm:$0xff]
    %v322 = vld [vmem:[#allocation6 + $0x1c0] sm:$0xff]
    %v323 = vld [vmem:[#allocation6 + $0x1c8] sm:$0xff]
    %v324 = vld [vmem:[#allocation6 + $0x1d0] sm:$0xff]
    %v325 = vld [vmem:[#allocation6 + $0x1d8] sm:$0xff]
    %v326 = vld [vmem:[#allocation6 + $0x1e0] sm:$0xff]
    %v327 = vld [vmem:[#allocation6 + $0x1e8] sm:$0xff]
    %v328 = vld [vmem:[#allocation6 + $0x1f0] sm:$0xff]
    %v329 = vld [vmem:[#allocation6 + $0x1f8] sm:$0xff]
    %330 = vmatpush.msra.mxu0 %v296
    %331 = vmatpush.msra.mxu0 %v294
    %332 = vmatpush.msra.mxu0 %v292
    %333 = vmatpush.msra.mxu0 %v290
    %334 = vmatpush.msra.mxu0 %v288
    %335 = vmatpush.msra.mxu0 %v286
    %336 = vmatpush.msra.mxu0 %v284
    %337 = vmatpush.msra.mxu0 %v282
    %338 = vmatpush.msra.mxu0 %v280
    %339 = vmatpush.msra.mxu0 %v278
    %340 = vmatpush.msra.mxu0 %v276
    %341 = vmatpush.msra.mxu0 %v274
    %342 = vmatpush.msra.mxu0 %v272
    %343 = vmatpush.msra.mxu0 %v270
    %344 = vmatpush.msra.mxu0 %v268
    %345 = vmatpush.msra.mxu0 %v266
    %346 = vmatmul.f32.gmra.mxu0 %v250
    %v347 = vpop.f32.mrf.mxu0
    %v348 = vadd.f32 0.0, %v347
    %349 = vmatmul.f32.gmra.mxu0 %v252
    %v350 = vpop.f32.mrf.mxu0
    %v351 = vadd.f32 0.0, %v350
    %352 = vmatmul.f32.gmra.mxu0 %v254
    %v353 = vpop.f32.mrf.mxu0
    %v354 = vadd.f32 0.0, %v353
    %355 = vmatmul.f32.gmra.mxu0 %v256
    %v356 = vpop.f32.mrf.mxu0
    %v357 = vadd.f32 0.0, %v356
    %358 = vmatmul.f32.gmra.mxu0 %v258
    %v359 = vpop.f32.mrf.mxu0
    %v360 = vadd.f32 0.0, %v359
    %361 = vmatmul.f32.gmra.mxu0 %v260
    %v362 = vpop.f32.mrf.mxu0
    %v363 = vadd.f32 0.0, %v362
    %364 = vmatmul.f32.gmra.mxu0 %v262
    %v365 = vpop.f32.mrf.mxu0
    %v366 = vadd.f32 0.0, %v365
    %367 = vmatmul.f32.gmra.mxu0 %v264
    %v368 = vpop.f32.mrf.mxu0
    %v369 = vadd.f32 0.0, %v368
    %370 = vdwg.mxu0
    %371 = vmatpush.msra.mxu0 %v328
    %372 = vmatpush.msra.mxu0 %v326
    %373 = vmatpush.msra.mxu0 %v324
    %374 = vmatpush.msra.mxu0 %v322
    %375 = vmatpush.msra.mxu0 %v320
    %376 = vmatpush.msra.mxu0 %v318
    %377 = vmatpush.msra.mxu0 %v316
    %378 = vmatpush.msra.mxu0 %v314
    %379 = vmatpush.msra.mxu0 %v312
    %380 = vmatpush.msra.mxu0 %v310
    %381 = vmatpush.msra.mxu0 %v308
    %382 = vmatpush.msra.mxu0 %v306
    %383 = vmatpush.msra.mxu0 %v304
    %384 = vmatpush.msra.mxu0 %v302
    %385 = vmatpush.msra.mxu0 %v300
    %386 = vmatpush.msra.mxu0 %v298
    %387 = vmatmul.f32.gmra.mxu0 %v251
    %v388 = vpop.f32.mrf.mxu0
    %v389 = vadd.f32 %v348, %v388
    %390 = vmatmul.f32.gmra.mxu0 %v253
    %v391 = vpop.f32.mrf.mxu0
    %v392 = vadd.f32 %v351, %v391
    %393 = vmatmul.f32.gmra.mxu0 %v255
    %v394 = vpop.f32.mrf.mxu0
    %v395 = vadd.f32 %v354, %v394
    %396 = vmatmul.f32.gmra.mxu0 %v257
    %v397 = vpop.f32.mrf.mxu0
    %v398 = vadd.f32 %v357, %v397
    %399 = vmatmul.f32.gmra.mxu0 %v259
    %v400 = vpop.f32.mrf.mxu0
    %v401 = vadd.f32 %v360, %v400
    %402 = vmatmul.f32.gmra.mxu0 %v261
    %v403 = vpop.f32.mrf.mxu0
    %v404 = vadd.f32 %v363, %v403
    %405 = vmatmul.f32.gmra.mxu0 %v263
    %v406 = vpop.f32.mrf.mxu0
    %v407 = vadd.f32 %v366, %v406
    %408 = vmatmul.f32.gmra.mxu0 %v265
    %v409 = vpop.f32.mrf.mxu0
    %v410 = vadd.f32 %v369, %v409
    %411 = vdwg.mxu0
    %412 = vmatpush.msra.mxu0 %v297
    %413 = vmatpush.msra.mxu0 %v295
    %414 = vmatpush.msra.mxu0 %v293
    %415 = vmatpush.msra.mxu0 %v291
    %416 = vmatpush.msra.mxu0 %v289
    %417 = vmatpush.msra.mxu0 %v287
    %418 = vmatpush.msra.mxu0 %v285
    %419 = vmatpush.msra.mxu0 %v283
    %420 = vmatpush.msra.mxu0 %v281
    %421 = vmatpush.msra.mxu0 %v279
    %422 = vmatpush.msra.mxu0 %v277
    %423 = vmatpush.msra.mxu0 %v275
    %424 = vmatpush.msra.mxu0 %v273
    %425 = vmatpush.msra.mxu0 %v271
    %426 = vmatpush.msra.mxu0 %v269
    %427 = vmatpush.msra.mxu0 %v267
    %428 = vmatmul.f32.gmra.mxu0 %v250
    %v429 = vpop.f32.mrf.mxu0
    %v430 = vadd.f32 0.0, %v429
    %431 = vmatmul.f32.gmra.mxu0 %v252
    %v432 = vpop.f32.mrf.mxu0
    %v433 = vadd.f32 0.0, %v432
    %434 = vmatmul.f32.gmra.mxu0 %v254
    %v435 = vpop.f32.mrf.mxu0
    %v436 = vadd.f32 0.0, %v435
    %437 = vmatmul.f32.gmra.mxu0 %v256
    %v438 = vpop.f32.mrf.mxu0
    %v439 = vadd.f32 0.0, %v438
    %440 = vmatmul.f32.gmra.mxu0 %v258
    %v441 = vpop.f32.mrf.mxu0
    %v442 = vadd.f32 0.0, %v441
    %443 = vmatmul.f32.gmra.mxu0 %v260
    %v444 = vpop.f32.mrf.mxu0
    %v445 = vadd.f32 0.0, %v444
    %446 = vmatmul.f32.gmra.mxu0 %v262
    %v447 = vpop.f32.mrf.mxu0
    %v448 = vadd.f32 0.0, %v447
    %449 = vmatmul.f32.gmra.mxu0 %v264
    %v450 = vpop.f32.mrf.mxu0
    %v451 = vadd.f32 0.0, %v450
    %452 = vdwg.mxu0
    %453 = vmatpush.msra.mxu0 %v329
    %454 = vmatpush.msra.mxu0 %v327
    %455 = vmatpush.msra.mxu0 %v325
    %456 = vmatpush.msra.mxu0 %v323
    %457 = vmatpush.msra.mxu0 %v321
    %458 = vmatpush.msra.mxu0 %v319
    %459 = vmatpush.msra.mxu0 %v317
    %460 = vmatpush.msra.mxu0 %v315
    %461 = vmatpush.msra.mxu0 %v313
    %462 = vmatpush.msra.mxu0 %v311
    %463 = vmatpush.msra.mxu0 %v309
    %464 = vmatpush.msra.mxu0 %v307
    %465 = vmatpush.msra.mxu0 %v305
    %466 = vmatpush.msra.mxu0 %v303
    %467 = vmatpush.msra.mxu0 %v301
    %468 = vmatpush.msra.mxu0 %v299
    %469 = vmatmul.f32.gmra.mxu0 %v251
    %v470 = vpop.f32.mrf.mxu0
    %v471 = vadd.f32 %v430, %v470
    %472 = vmatmul.f32.gmra.mxu0 %v253
    %v473 = vpop.f32.mrf.mxu0
    %v474 = vadd.f32 %v433, %v473
    %475 = vmatmul.f32.gmra.mxu0 %v255
    %v476 = vpop.f32.mrf.mxu0
    %v477 = vadd.f32 %v436, %v476
    %478 = vmatmul.f32.gmra.mxu0 %v257
    %v479 = vpop.f32.mrf.mxu0
    %v480 = vadd.f32 %v439, %v479
    %481 = vmatmul.f32.gmra.mxu0 %v259
    %v482 = vpop.f32.mrf.mxu0
    %v483 = vadd.f32 %v442, %v482
    %484 = vmatmul.f32.gmra.mxu0 %v261
    %v485 = vpop.f32.mrf.mxu0
    %v486 = vadd.f32 %v445, %v485
    %487 = vmatmul.f32.gmra.mxu0 %v263
    %v488 = vpop.f32.mrf.mxu0
    %v489 = vadd.f32 %v448, %v488
    %490 = vmatmul.f32.gmra.mxu0 %v265
    %v491 = vpop.f32.mrf.mxu0
    %v492 = vadd.f32 %v451, %v491
    %493 = vdwg.mxu0
    %s494 = scalar_lea.vmem [#allocation9], 1
    %v495 = vld [vmem:[%s494] ss:$8 sm:$0x3]
    %v497 = vperm.slane %v495, 0
    %v498 = vperm.slane %v495, 1
    %501 = vmatpush.msra.mxu0 0.0
    %502 = vmatpush.msra.mxu0 0.0
    %503 = vmatpush.msra.mxu0 0.0
    %504 = vmatpush.msra.mxu0 0.0
    %505 = vmatpush.msra.mxu0 0.0
    %506 = vmatpush.msra.mxu0 0.0
    %507 = vmatpush.msra.mxu0 0.0
    %508 = vmatpush.msra.mxu0 0.0
    %509 = vmatpush.msra.mxu0 %v410
    %510 = vmatpush.msra.mxu0 %v407
    %511 = vmatpush.msra.mxu0 %v404
    %512 = vmatpush.msra.mxu0 %v401
    %513 = vmatpush.msra.mxu0 %v398
    %514 = vmatpush.msra.mxu0 %v395
    %515 = vmatpush.msra.mxu0 %v392
    %516 = vmatpush.msra.mxu0 %v389
    %517 = vmatmul.f32.gmra.mxu0 %v145
    %v518 = vpop.f32.mrf.mxu0
    %v519 = vadd.f32 %v497, %v518
    %520 = vmatmul.f32.gmra.mxu0 %v148
    %v521 = vpop.f32.mrf.mxu0
    %v522 = vadd.f32 %v497, %v521
    %523 = vmatmul.f32.gmra.mxu0 %v151
    %v524 = vpop.f32.mrf.mxu0
    %v525 = vadd.f32 %v497, %v524
    %526 = vmatmul.f32.gmra.mxu0 %v154
    %v527 = vpop.f32.mrf.mxu0
    %v528 = vadd.f32 %v497, %v527
    %529 = vmatmul.f32.gmra.mxu0 %v157
    %v530 = vpop.f32.mrf.mxu0
    %v531 = vadd.f32 %v497, %v530
    %532 = vmatmul.f32.gmra.mxu0 %v160
    %v533 = vpop.f32.mrf.mxu0
    %v534 = vadd.f32 %v497, %v533
    %535 = vmatmul.f32.gmra.mxu0 %v163
    %v536 = vpop.f32.mrf.mxu0
    %v537 = vadd.f32 %v497, %v536
    %538 = vmatmul.f32.gmra.mxu0 %v166
    %v539 = vpop.f32.mrf.mxu0
    %v540 = vadd.f32 %v497, %v539
    %541 = vdwg.mxu0
    %542 = vmatpush.msra.mxu0 0.0
    %543 = vmatpush.msra.mxu0 0.0
    %544 = vmatpush.msra.mxu0 0.0
    %545 = vmatpush.msra.mxu0 0.0
    %546 = vmatpush.msra.mxu0 0.0
    %547 = vmatpush.msra.mxu0 0.0
    %548 = vmatpush.msra.mxu0 0.0
    %549 = vmatpush.msra.mxu0 0.0
    %550 = vmatpush.msra.mxu0 %v492
    %551 = vmatpush.msra.mxu0 %v489
    %552 = vmatpush.msra.mxu0 %v486
    %553 = vmatpush.msra.mxu0 %v483
    %554 = vmatpush.msra.mxu0 %v480
    %555 = vmatpush.msra.mxu0 %v477
    %556 = vmatpush.msra.mxu0 %v474
    %557 = vmatpush.msra.mxu0 %v471
    %558 = vmatmul.f32.gmra.mxu0 %v145
    %v559 = vpop.f32.mrf.mxu0
    %v560 = vadd.f32 %v498, %v559
    %561 = vmatmul.f32.gmra.mxu0 %v148
    %v562 = vpop.f32.mrf.mxu0
    %v563 = vadd.f32 %v498, %v562
    %564 = vmatmul.f32.gmra.mxu0 %v151
    %v565 = vpop.f32.mrf.mxu0
    %v566 = vadd.f32 %v498, %v565
    %567 = vmatmul.f32.gmra.mxu0 %v154
    %v568 = vpop.f32.mrf.mxu0
    %v569 = vadd.f32 %v498, %v568
    %570 = vmatmul.f32.gmra.mxu0 %v157
    %v571 = vpop.f32.mrf.mxu0
    %v572 = vadd.f32 %v498, %v571
    %573 = vmatmul.f32.gmra.mxu0 %v160
    %v574 = vpop.f32.mrf.mxu0
    %v575 = vadd.f32 %v498, %v574
    %576 = vmatmul.f32.gmra.mxu0 %v163
    %v577 = vpop.f32.mrf.mxu0
    %v578 = vadd.f32 %v498, %v577
    %579 = vmatmul.f32.gmra.mxu0 %v166
    %v580 = vpop.f32.mrf.mxu0
    %v581 = vadd.f32 %v498, %v580
    %582 = vdwg.mxu0
    %v583 = vmax.f32 %v519, 0.0
    %v584 = vmax.f32 %v560, 0.0
    %v585 = vmax.f32 %v522, 0.0
    %v586 = vmax.f32 %v563, 0.0
    %v587 = vmax.f32 %v525, 0.0
    %v588 = vmax.f32 %v566, 0.0
    %v589 = vmax.f32 %v528, 0.0
    %v590 = vmax.f32 %v569, 0.0
    %v591 = vmax.f32 %v531, 0.0
    %v592 = vmax.f32 %v572, 0.0
    %v593 = vmax.f32 %v534, 0.0
    %v594 = vmax.f32 %v575, 0.0
    %v595 = vmax.f32 %v537, 0.0
    %v596 = vmax.f32 %v578, 0.0
    %v597 = vmax.f32 %v540, 0.0
    %v598 = vmax.f32 %v581, 0.0
    %s599 = scalar_lea.vmem [#allocation6], 512
    %v600 = vld [vmem:[%s599] sm:$0xff]
    %v601 = vld [vmem:[%s599 + $0x8] sm:$0xff]
    %v602 = vld [vmem:[%s599 + $0x10] sm:$0xff]
    %v603 = vld [vmem:[%s599 + $0x18] sm:$0xff]
    %v604 = vld [vmem:[%s599 + $0x20] sm:$0xff]
    %v605 = vld [vmem:[%s599 + $0x28] sm:$0xff]
    %v606 = vld [vmem:[%s599 + $0x30] sm:$0xff]
    %v607 = vld [vmem:[%s599 + $0x38] sm:$0xff]
    %v608 = vld [vmem:[%s599 + $0x40] sm:$0xff]
    %v609 = vld [vmem:[%s599 + $0x48] sm:$0xff]
    %v610 = vld [vmem:[%s599 + $0x50] sm:$0xff]
    %v611 = vld [vmem:[%s599 + $0x58] sm:$0xff]
    %v612 = vld [vmem:[%s599 + $0x60] sm:$0xff]
    %v613 = vld [vmem:[%s599 + $0x68] sm:$0xff]
    %v614 = vld [vmem:[%s599 + $0x70] sm:$0xff]
    %v615 = vld [vmem:[%s599 + $0x78] sm:$0xff]
    %v616 = vld [vmem:[%s599 + $0x80] sm:$0xff]
    %v617 = vld [vmem:[%s599 + $0x88] sm:$0xff]
    %v618 = vld [vmem:[%s599 + $0x90] sm:$0xff]
    %v619 = vld [vmem:[%s599 + $0x98] sm:$0xff]
    %v620 = vld [vmem:[%s599 + $0xa0] sm:$0xff]
    %v621 = vld [vmem:[%s599 + $0xa8] sm:$0xff]
    %v622 = vld [vmem:[%s599 + $0xb0] sm:$0xff]
    %v623 = vld [vmem:[%s599 + $0xb8] sm:$0xff]
    %v624 = vld [vmem:[%s599 + $0xc0] sm:$0xff]
    %v625 = vld [vmem:[%s599 + $0xc8] sm:$0xff]
    %v626 = vld [vmem:[%s599 + $0xd0] sm:$0xff]
    %v627 = vld [vmem:[%s599 + $0xd8] sm:$0xff]
    %v628 = vld [vmem:[%s599 + $0xe0] sm:$0xff]
    %v629 = vld [vmem:[%s599 + $0xe8] sm:$0xff]
    %v630 = vld [vmem:[%s599 + $0xf0] sm:$0xff]
    %v631 = vld [vmem:[%s599 + $0xf8] sm:$0xff]
    %v632 = vld [vmem:[%s599 + $0x100] sm:$0xff]
    %v633 = vld [vmem:[%s599 + $0x108] sm:$0xff]
    %v634 = vld [vmem:[%s599 + $0x110] sm:$0xff]
    %v635 = vld [vmem:[%s599 + $0x118] sm:$0xff]
    %v636 = vld [vmem:[%s599 + $0x120] sm:$0xff]
    %v637 = vld [vmem:[%s599 + $0x128] sm:$0xff]
    %v638 = vld [vmem:[%s599 + $0x130] sm:$0xff]
    %v639 = vld [vmem:[%s599 + $0x138] sm:$0xff]
    %v640 = vld [vmem:[%s599 + $0x140] sm:$0xff]
    %v641 = vld [vmem:[%s599 + $0x148] sm:$0xff]
    %v642 = vld [vmem:[%s599 + $0x150] sm:$0xff]
    %v643 = vld [vmem:[%s599 + $0x158] sm:$0xff]
    %v644 = vld [vmem:[%s599 + $0x160] sm:$0xff]
    %v645 = vld [vmem:[%s599 + $0x168] sm:$0xff]
    %v646 = vld [vmem:[%s599 + $0x170] sm:$0xff]
    %v647 = vld [vmem:[%s599 + $0x178] sm:$0xff]
    %v648 = vld [vmem:[%s599 + $0x180] sm:$0xff]
    %v649 = vld [vmem:[%s599 + $0x188] sm:$0xff]
    %v650 = vld [vmem:[%s599 + $0x190] sm:$0xff]
    %v651 = vld [vmem:[%s599 + $0x198] sm:$0xff]
    %v652 = vld [vmem:[%s599 + $0x1a0] sm:$0xff]
    %v653 = vld [vmem:[%s599 + $0x1a8] sm:$0xff]
    %v654 = vld [vmem:[%s599 + $0x1b0] sm:$0xff]
    %v655 = vld [vmem:[%s599 + $0x1b8] sm:$0xff]
    %v656 = vld [vmem:[%s599 + $0x1c0] sm:$0xff]
    %v657 = vld [vmem:[%s599 + $0x1c8] sm:$0xff]
    %v658 = vld [vmem:[%s599 + $0x1d0] sm:$0xff]
    %v659 = vld [vmem:[%s599 + $0x1d8] sm:$0xff]
    %v660 = vld [vmem:[%s599 + $0x1e0] sm:$0xff]
    %v661 = vld [vmem:[%s599 + $0x1e8] sm:$0xff]
    %v662 = vld [vmem:[%s599 + $0x1f0] sm:$0xff]
    %v663 = vld [vmem:[%s599 + $0x1f8] sm:$0xff]
    %664 = vmatpush.msra.mxu0 %v630
    %665 = vmatpush.msra.mxu0 %v628
    %666 = vmatpush.msra.mxu0 %v626
    %667 = vmatpush.msra.mxu0 %v624
    %668 = vmatpush.msra.mxu0 %v622
    %669 = vmatpush.msra.mxu0 %v620
    %670 = vmatpush.msra.mxu0 %v618
    %671 = vmatpush.msra.mxu0 %v616
    %672 = vmatpush.msra.mxu0 %v614
    %673 = vmatpush.msra.mxu0 %v612
    %674 = vmatpush.msra.mxu0 %v610
    %675 = vmatpush.msra.mxu0 %v608
    %676 = vmatpush.msra.mxu0 %v606
    %677 = vmatpush.msra.mxu0 %v604
    %678 = vmatpush.msra.mxu0 %v602
    %679 = vmatpush.msra.mxu0 %v600
    %680 = vmatmul.f32.gmra.mxu0 %v583
    %v681 = vpop.f32.mrf.mxu0
    %v682 = vadd.f32 0.0, %v681
    %683 = vmatmul.f32.gmra.mxu0 %v585
    %v684 = vpop.f32.mrf.mxu0
    %v685 = vadd.f32 0.0, %v684
    %686 = vmatmul.f32.gmra.mxu0 %v587
    %v687 = vpop.f32.mrf.mxu0
    %v688 = vadd.f32 0.0, %v687
    %689 = vmatmul.f32.gmra.mxu0 %v589
    %v690 = vpop.f32.mrf.mxu0
    %v691 = vadd.f32 0.0, %v690
    %692 = vmatmul.f32.gmra.mxu0 %v591
    %v693 = vpop.f32.mrf.mxu0
    %v694 = vadd.f32 0.0, %v693
    %695 = vmatmul.f32.gmra.mxu0 %v593
    %v696 = vpop.f32.mrf.mxu0
    %v697 = vadd.f32 0.0, %v696
    %698 = vmatmul.f32.gmra.mxu0 %v595
    %v699 = vpop.f32.mrf.mxu0
    %v700 = vadd.f32 0.0, %v699
    %701 = vmatmul.f32.gmra.mxu0 %v597
    %v702 = vpop.f32.mrf.mxu0
    %v703 = vadd.f32 0.0, %v702
    %704 = vdwg.mxu0
    %705 = vmatpush.msra.mxu0 %v662
    %706 = vmatpush.msra.mxu0 %v660
    %707 = vmatpush.msra.mxu0 %v658
    %708 = vmatpush.msra.mxu0 %v656
    %709 = vmatpush.msra.mxu0 %v654
    %710 = vmatpush.msra.mxu0 %v652
    %711 = vmatpush.msra.mxu0 %v650
    %712 = vmatpush.msra.mxu0 %v648
    %713 = vmatpush.msra.mxu0 %v646
    %714 = vmatpush.msra.mxu0 %v644
    %715 = vmatpush.msra.mxu0 %v642
    %716 = vmatpush.msra.mxu0 %v640
    %717 = vmatpush.msra.mxu0 %v638
    %718 = vmatpush.msra.mxu0 %v636
    %719 = vmatpush.msra.mxu0 %v634
    %720 = vmatpush.msra.mxu0 %v632
    %721 = vmatmul.f32.gmra.mxu0 %v584
    %v722 = vpop.f32.mrf.mxu0
    %v723 = vadd.f32 %v682, %v722
    %724 = vmatmul.f32.gmra.mxu0 %v586
    %v725 = vpop.f32.mrf.mxu0
    %v726 = vadd.f32 %v685, %v725
    %727 = vmatmul.f32.gmra.mxu0 %v588
    %v728 = vpop.f32.mrf.mxu0
    %v729 = vadd.f32 %v688, %v728
    %730 = vmatmul.f32.gmra.mxu0 %v590
    %v731 = vpop.f32.mrf.mxu0
    %v732 = vadd.f32 %v691, %v731
    %733 = vmatmul.f32.gmra.mxu0 %v592
    %v734 = vpop.f32.mrf.mxu0
    %v735 = vadd.f32 %v694, %v734
    %736 = vmatmul.f32.gmra.mxu0 %v594
    %v737 = vpop.f32.mrf.mxu0
    %v738 = vadd.f32 %v697, %v737
    %739 = vmatmul.f32.gmra.mxu0 %v596
    %v740 = vpop.f32.mrf.mxu0
    %v741 = vadd.f32 %v700, %v740
    %742 = vmatmul.f32.gmra.mxu0 %v598
    %v743 = vpop.f32.mrf.mxu0
    %v744 = vadd.f32 %v703, %v743
    %745 = vdwg.mxu0
    %746 = vmatpush.msra.mxu0 %v631
    %747 = vmatpush.msra.mxu0 %v629
    %748 = vmatpush.msra.mxu0 %v627
    %749 = vmatpush.msra.mxu0 %v625
    %750 = vmatpush.msra.mxu0 %v623
    %751 = vmatpush.msra.mxu0 %v621
    %752 = vmatpush.msra.mxu0 %v619
    %753 = vmatpush.msra.mxu0 %v617
    %754 = vmatpush.msra.mxu0 %v615
    %755 = vmatpush.msra.mxu0 %v613
    %756 = vmatpush.msra.mxu0 %v611
    %757 = vmatpush.msra.mxu0 %v609
    %758 = vmatpush.msra.mxu0 %v607
    %759 = vmatpush.msra.mxu0 %v605
    %760 = vmatpush.msra.mxu0 %v603
    %761 = vmatpush.msra.mxu0 %v601
    %762 = vmatmul.f32.gmra.mxu0 %v583
    %v763 = vpop.f32.mrf.mxu0
    %v764 = vadd.f32 0.0, %v763
    %765 = vmatmul.f32.gmra.mxu0 %v585
    %v766 = vpop.f32.mrf.mxu0
    %v767 = vadd.f32 0.0, %v766
    %768 = vmatmul.f32.gmra.mxu0 %v587
    %v769 = vpop.f32.mrf.mxu0
    %v770 = vadd.f32 0.0, %v769
    %771 = vmatmul.f32.gmra.mxu0 %v589
    %v772 = vpop.f32.mrf.mxu0
    %v773 = vadd.f32 0.0, %v772
    %774 = vmatmul.f32.gmra.mxu0 %v591
    %v775 = vpop.f32.mrf.mxu0
    %v776 = vadd.f32 0.0, %v775
    %777 = vmatmul.f32.gmra.mxu0 %v593
    %v778 = vpop.f32.mrf.mxu0
    %v779 = vadd.f32 0.0, %v778
    %780 = vmatmul.f32.gmra.mxu0 %v595
    %v781 = vpop.f32.mrf.mxu0
    %v782 = vadd.f32 0.0, %v781
    %783 = vmatmul.f32.gmra.mxu0 %v597
    %v784 = vpop.f32.mrf.mxu0
    %v785 = vadd.f32 0.0, %v784
    %786 = vdwg.mxu0
    %787 = vmatpush.msra.mxu0 %v663
    %788 = vmatpush.msra.mxu0 %v661
    %789 = vmatpush.msra.mxu0 %v659
    %790 = vmatpush.msra.mxu0 %v657
    %791 = vmatpush.msra.mxu0 %v655
    %792 = vmatpush.msra.mxu0 %v653
    %793 = vmatpush.msra.mxu0 %v651
    %794 = vmatpush.msra.mxu0 %v649
    %795 = vmatpush.msra.mxu0 %v647
    %796 = vmatpush.msra.mxu0 %v645
    %797 = vmatpush.msra.mxu0 %v643
    %798 = vmatpush.msra.mxu0 %v641
    %799 = vmatpush.msra.mxu0 %v639
    %800 = vmatpush.msra.mxu0 %v637
    %801 = vmatpush.msra.mxu0 %v635
    %802 = vmatpush.msra.mxu0 %v633
    %803 = vmatmul.f32.gmra.mxu0 %v584
    %v804 = vpop.f32.mrf.mxu0
    %v805 = vadd.f32 %v764, %v804
    %806 = vmatmul.f32.gmra.mxu0 %v586
    %v807 = vpop.f32.mrf.mxu0
    %v808 = vadd.f32 %v767, %v807
    %809 = vmatmul.f32.gmra.mxu0 %v588
    %v810 = vpop.f32.mrf.mxu0
    %v811 = vadd.f32 %v770, %v810
    %812 = vmatmul.f32.gmra.mxu0 %v590
    %v813 = vpop.f32.mrf.mxu0
    %v814 = vadd.f32 %v773, %v813
    %815 = vmatmul.f32.gmra.mxu0 %v592
    %v816 = vpop.f32.mrf.mxu0
    %v817 = vadd.f32 %v776, %v816
    %818 = vmatmul.f32.gmra.mxu0 %v594
    %v819 = vpop.f32.mrf.mxu0
    %v820 = vadd.f32 %v779, %v819
    %821 = vmatmul.f32.gmra.mxu0 %v596
    %v822 = vpop.f32.mrf.mxu0
    %v823 = vadd.f32 %v782, %v822
    %824 = vmatmul.f32.gmra.mxu0 %v598
    %v825 = vpop.f32.mrf.mxu0
    %v826 = vadd.f32 %v785, %v825
    %827 = vdwg.mxu0
    %s828 = scalar_lea.vmem [#allocation9], 2
    %v829 = vld [vmem:[%s828] ss:$8 sm:$0x3]
    %v831 = vperm.slane %v829, 0
    %v832 = vperm.slane %v829, 1
    %835 = vmatpush.msra.mxu0 0.0
    %836 = vmatpush.msra.mxu0 0.0
    %837 = vmatpush.msra.mxu0 0.0
    %838 = vmatpush.msra.mxu0 0.0
    %839 = vmatpush.msra.mxu0 0.0
    %840 = vmatpush.msra.mxu0 0.0
    %841 = vmatpush.msra.mxu0 0.0
    %842 = vmatpush.msra.mxu0 0.0
    %843 = vmatpush.msra.mxu0 %v744
    %844 = vmatpush.msra.mxu0 %v741
    %845 = vmatpush.msra.mxu0 %v738
    %846 = vmatpush.msra.mxu0 %v735
    %847 = vmatpush.msra.mxu0 %v732
    %848 = vmatpush.msra.mxu0 %v729
    %849 = vmatpush.msra.mxu0 %v726
    %850 = vmatpush.msra.mxu0 %v723
    %851 = vmatmul.f32.gmra.mxu0 %v145
    %v852 = vpop.f32.mrf.mxu0
    %v853 = vadd.f32 %v831, %v852
    %854 = vmatmul.f32.gmra.mxu0 %v148
    %v855 = vpop.f32.mrf.mxu0
    %v856 = vadd.f32 %v831, %v855
    %857 = vmatmul.f32.gmra.mxu0 %v151
    %v858 = vpop.f32.mrf.mxu0
    %v859 = vadd.f32 %v831, %v858
    %860 = vmatmul.f32.gmra.mxu0 %v154
    %v861 = vpop.f32.mrf.mxu0
    %v862 = vadd.f32 %v831, %v861
    %863 = vmatmul.f32.gmra.mxu0 %v157
    %v864 = vpop.f32.mrf.mxu0
    %v865 = vadd.f32 %v831, %v864
    %866 = vmatmul.f32.gmra.mxu0 %v160
    %v867 = vpop.f32.mrf.mxu0
    %v868 = vadd.f32 %v831, %v867
    %869 = vmatmul.f32.gmra.mxu0 %v163
    %v870 = vpop.f32.mrf.mxu0
    %v871 = vadd.f32 %v831, %v870
    %872 = vmatmul.f32.gmra.mxu0 %v166
    %v873 = vpop.f32.mrf.mxu0
    %v874 = vadd.f32 %v831, %v873
    %875 = vdwg.mxu0
    %876 = vmatpush.msra.mxu0 0.0
    %877 = vmatpush.msra.mxu0 0.0
    %878 = vmatpush.msra.mxu0 0.0
    %879 = vmatpush.msra.mxu0 0.0
    %880 = vmatpush.msra.mxu0 0.0
    %881 = vmatpush.msra.mxu0 0.0
    %882 = vmatpush.msra.mxu0 0.0
    %883 = vmatpush.msra.mxu0 0.0
    %884 = vmatpush.msra.mxu0 %v826
    %885 = vmatpush.msra.mxu0 %v823
    %886 = vmatpush.msra.mxu0 %v820
    %887 = vmatpush.msra.mxu0 %v817
    %888 = vmatpush.msra.mxu0 %v814
    %889 = vmatpush.msra.mxu0 %v811
    %890 = vmatpush.msra.mxu0 %v808
    %891 = vmatpush.msra.mxu0 %v805
    %892 = vmatmul.f32.gmra.mxu0 %v145
    %v893 = vpop.f32.mrf.mxu0
    %v894 = vadd.f32 %v832, %v893
    %895 = vmatmul.f32.gmra.mxu0 %v148
    %v896 = vpop.f32.mrf.mxu0
    %v897 = vadd.f32 %v832, %v896
    %898 = vmatmul.f32.gmra.mxu0 %v151
    %v899 = vpop.f32.mrf.mxu0
    %v900 = vadd.f32 %v832, %v899
    %901 = vmatmul.f32.gmra.mxu0 %v154
    %v902 = vpop.f32.mrf.mxu0
    %v903 = vadd.f32 %v832, %v902
    %904 = vmatmul.f32.gmra.mxu0 %v157
    %v905 = vpop.f32.mrf.mxu0
    %v906 = vadd.f32 %v832, %v905
    %907 = vmatmul.f32.gmra.mxu0 %v160
    %v908 = vpop.f32.mrf.mxu0
    %v909 = vadd.f32 %v832, %v908
    %910 = vmatmul.f32.gmra.mxu0 %v163
    %v911 = vpop.f32.mrf.mxu0
    %v912 = vadd.f32 %v832, %v911
    %913 = vmatmul.f32.gmra.mxu0 %v166
    %v914 = vpop.f32.mrf.mxu0
    %v915 = vadd.f32 %v832, %v914
    %916 = vdwg.mxu0
    %v917 = vmax.f32 %v853, 0.0
    %v918 = vmax.f32 %v894, 0.0
    %v919 = vmax.f32 %v856, 0.0
    %v920 = vmax.f32 %v897, 0.0
    %v921 = vmax.f32 %v859, 0.0
    %v922 = vmax.f32 %v900, 0.0
    %v923 = vmax.f32 %v862, 0.0
    %v924 = vmax.f32 %v903, 0.0
    %v925 = vmax.f32 %v865, 0.0
    %v926 = vmax.f32 %v906, 0.0
    %v927 = vmax.f32 %v868, 0.0
    %v928 = vmax.f32 %v909, 0.0
    %v929 = vmax.f32 %v871, 0.0
    %v930 = vmax.f32 %v912, 0.0
    %v931 = vmax.f32 %v874, 0.0
    %v932 = vmax.f32 %v915, 0.0
    %s933 = scalar_lea.vmem [#allocation6], 1024
    %v934 = vld [vmem:[%s933] sm:$0xff]
    %v935 = vld [vmem:[%s933 + $0x8] sm:$0xff]
    %v936 = vld [vmem:[%s933 + $0x10] sm:$0xff]
    %v937 = vld [vmem:[%s933 + $0x18] sm:$0xff]
    %v938 = vld [vmem:[%s933 + $0x20] sm:$0xff]
    %v939 = vld [vmem:[%s933 + $0x28] sm:$0xff]
    %v940 = vld [vmem:[%s933 + $0x30] sm:$0xff]
    %v941 = vld [vmem:[%s933 + $0x38] sm:$0xff]
    %v942 = vld [vmem:[%s933 + $0x40] sm:$0xff]
    %v943 = vld [vmem:[%s933 + $0x48] sm:$0xff]
    %v944 = vld [vmem:[%s933 + $0x50] sm:$0xff]
    %v945 = vld [vmem:[%s933 + $0x58] sm:$0xff]
    %v946 = vld [vmem:[%s933 + $0x60] sm:$0xff]
    %v947 = vld [vmem:[%s933 + $0x68] sm:$0xff]
    %v948 = vld [vmem:[%s933 + $0x70] sm:$0xff]
    %v949 = vld [vmem:[%s933 + $0x78] sm:$0xff]
    %v950 = vld [vmem:[%s933 + $0x80] sm:$0xff]
    %v951 = vld [vmem:[%s933 + $0x88] sm:$0xff]
    %v952 = vld [vmem:[%s933 + $0x90] sm:$0xff]
    %v953 = vld [vmem:[%s933 + $0x98] sm:$0xff]
    %v954 = vld [vmem:[%s933 + $0xa0] sm:$0xff]
    %v955 = vld [vmem:[%s933 + $0xa8] sm:$0xff]
    %v956 = vld [vmem:[%s933 + $0xb0] sm:$0xff]
    %v957 = vld [vmem:[%s933 + $0xb8] sm:$0xff]
    %v958 = vld [vmem:[%s933 + $0xc0] sm:$0xff]
    %v959 = vld [vmem:[%s933 + $0xc8] sm:$0xff]
    %v960 = vld [vmem:[%s933 + $0xd0] sm:$0xff]
    %v961 = vld [vmem:[%s933 + $0xd8] sm:$0xff]
    %v962 = vld [vmem:[%s933 + $0xe0] sm:$0xff]
    %v963 = vld [vmem:[%s933 + $0xe8] sm:$0xff]
    %v964 = vld [vmem:[%s933 + $0xf0] sm:$0xff]
    %v965 = vld [vmem:[%s933 + $0xf8] sm:$0xff]
    %v966 = vld [vmem:[%s933 + $0x100] sm:$0xff]
    %v967 = vld [vmem:[%s933 + $0x108] sm:$0xff]
    %v968 = vld [vmem:[%s933 + $0x110] sm:$0xff]
    %v969 = vld [vmem:[%s933 + $0x118] sm:$0xff]
    %v970 = vld [vmem:[%s933 + $0x120] sm:$0xff]
    %v971 = vld [vmem:[%s933 + $0x128] sm:$0xff]
    %v972 = vld [vmem:[%s933 + $0x130] sm:$0xff]
    %v973 = vld [vmem:[%s933 + $0x138] sm:$0xff]
    %v974 = vld [vmem:[%s933 + $0x140] sm:$0xff]
    %v975 = vld [vmem:[%s933 + $0x148] sm:$0xff]
    %v976 = vld [vmem:[%s933 + $0x150] sm:$0xff]
    %v977 = vld [vmem:[%s933 + $0x158] sm:$0xff]
    %v978 = vld [vmem:[%s933 + $0x160] sm:$0xff]
    %v979 = vld [vmem:[%s933 + $0x168] sm:$0xff]
    %v980 = vld [vmem:[%s933 + $0x170] sm:$0xff]
    %v981 = vld [vmem:[%s933 + $0x178] sm:$0xff]
    %v982 = vld [vmem:[%s933 + $0x180] sm:$0xff]
    %v983 = vld [vmem:[%s933 + $0x188] sm:$0xff]
    %v984 = vld [vmem:[%s933 + $0x190] sm:$0xff]
    %v985 = vld [vmem:[%s933 + $0x198] sm:$0xff]
    %v986 = vld [vmem:[%s933 + $0x1a0] sm:$0xff]
    %v987 = vld [vmem:[%s933 + $0x1a8] sm:$0xff]
    %v988 = vld [vmem:[%s933 + $0x1b0] sm:$0xff]
    %v989 = vld [vmem:[%s933 + $0x1b8] sm:$0xff]
    %v990 = vld [vmem:[%s933 + $0x1c0] sm:$0xff]
    %v991 = vld [vmem:[%s933 + $0x1c8] sm:$0xff]
    %v992 = vld [vmem:[%s933 + $0x1d0] sm:$0xff]
    %v993 = vld [vmem:[%s933 + $0x1d8] sm:$0xff]
    %v994 = vld [vmem:[%s933 + $0x1e0] sm:$0xff]
    %v995 = vld [vmem:[%s933 + $0x1e8] sm:$0xff]
    %v996 = vld [vmem:[%s933 + $0x1f0] sm:$0xff]
    %v997 = vld [vmem:[%s933 + $0x1f8] sm:$0xff]
    %998 = vmatpush.msra.mxu0 %v964
    %999 = vmatpush.msra.mxu0 %v962
    %1000 = vmatpush.msra.mxu0 %v960
    %1001 = vmatpush.msra.mxu0 %v958
    %1002 = vmatpush.msra.mxu0 %v956
    %1003 = vmatpush.msra.mxu0 %v954
    %1004 = vmatpush.msra.mxu0 %v952
    %1005 = vmatpush.msra.mxu0 %v950
    %1006 = vmatpush.msra.mxu0 %v948
    %1007 = vmatpush.msra.mxu0 %v946
    %1008 = vmatpush.msra.mxu0 %v944
    %1009 = vmatpush.msra.mxu0 %v942
    %1010 = vmatpush.msra.mxu0 %v940
    %1011 = vmatpush.msra.mxu0 %v938
    %1012 = vmatpush.msra.mxu0 %v936
    %1013 = vmatpush.msra.mxu0 %v934
    %1014 = vmatmul.f32.gmra.mxu0 %v917
    %v1015 = vpop.f32.mrf.mxu0
    %v1016 = vadd.f32 0.0, %v1015
    %1017 = vmatmul.f32.gmra.mxu0 %v919
    %v1018 = vpop.f32.mrf.mxu0
    %v1019 = vadd.f32 0.0, %v1018
    %1020 = vmatmul.f32.gmra.mxu0 %v921
    %v1021 = vpop.f32.mrf.mxu0
    %v1022 = vadd.f32 0.0, %v1021
    %1023 = vmatmul.f32.gmra.mxu0 %v923
    %v1024 = vpop.f32.mrf.mxu0
    %v1025 = vadd.f32 0.0, %v1024
    %1026 = vmatmul.f32.gmra.mxu0 %v925
    %v1027 = vpop.f32.mrf.mxu0
    %v1028 = vadd.f32 0.0, %v1027
    %1029 = vmatmul.f32.gmra.mxu0 %v927
    %v1030 = vpop.f32.mrf.mxu0
    %v1031 = vadd.f32 0.0, %v1030
    %1032 = vmatmul.f32.gmra.mxu0 %v929
    %v1033 = vpop.f32.mrf.mxu0
    %v1034 = vadd.f32 0.0, %v1033
    %1035 = vmatmul.f32.gmra.mxu0 %v931
    %v1036 = vpop.f32.mrf.mxu0
    %v1037 = vadd.f32 0.0, %v1036
    %1038 = vdwg.mxu0
    %1039 = vmatpush.msra.mxu0 %v996
    %1040 = vmatpush.msra.mxu0 %v994
    %1041 = vmatpush.msra.mxu0 %v992
    %1042 = vmatpush.msra.mxu0 %v990
    %1043 = vmatpush.msra.mxu0 %v988
    %1044 = vmatpush.msra.mxu0 %v986
    %1045 = vmatpush.msra.mxu0 %v984
    %1046 = vmatpush.msra.mxu0 %v982
    %1047 = vmatpush.msra.mxu0 %v980
    %1048 = vmatpush.msra.mxu0 %v978
    %1049 = vmatpush.msra.mxu0 %v976
    %1050 = vmatpush.msra.mxu0 %v974
    %1051 = vmatpush.msra.mxu0 %v972
    %1052 = vmatpush.msra.mxu0 %v970
    %1053 = vmatpush.msra.mxu0 %v968
    %1054 = vmatpush.msra.mxu0 %v966
    %1055 = vmatmul.f32.gmra.mxu0 %v918
    %v1056 = vpop.f32.mrf.mxu0
    %v1057 = vadd.f32 %v1016, %v1056
    %1058 = vmatmul.f32.gmra.mxu0 %v920
    %v1059 = vpop.f32.mrf.mxu0
    %v1060 = vadd.f32 %v1019, %v1059
    %1061 = vmatmul.f32.gmra.mxu0 %v922
    %v1062 = vpop.f32.mrf.mxu0
    %v1063 = vadd.f32 %v1022, %v1062
    %1064 = vmatmul.f32.gmra.mxu0 %v924
    %v1065 = vpop.f32.mrf.mxu0
    %v1066 = vadd.f32 %v1025, %v1065
    %1067 = vmatmul.f32.gmra.mxu0 %v926
    %v1068 = vpop.f32.mrf.mxu0
    %v1069 = vadd.f32 %v1028, %v1068
    %1070 = vmatmul.f32.gmra.mxu0 %v928
    %v1071 = vpop.f32.mrf.mxu0
    %v1072 = vadd.f32 %v1031, %v1071
    %1073 = vmatmul.f32.gmra.mxu0 %v930
    %v1074 = vpop.f32.mrf.mxu0
    %v1075 = vadd.f32 %v1034, %v1074
    %1076 = vmatmul.f32.gmra.mxu0 %v932
    %v1077 = vpop.f32.mrf.mxu0
    %v1078 = vadd.f32 %v1037, %v1077
    %1079 = vdwg.mxu0
    %1080 = vmatpush.msra.mxu0 %v965
    %1081 = vmatpush.msra.mxu0 %v963
    %1082 = vmatpush.msra.mxu0 %v961
    %1083 = vmatpush.msra.mxu0 %v959
    %1084 = vmatpush.msra.mxu0 %v957
    %1085 = vmatpush.msra.mxu0 %v955
    %1086 = vmatpush.msra.mxu0 %v953
    %1087 = vmatpush.msra.mxu0 %v951
    %1088 = vmatpush.msra.mxu0 %v949
    %1089 = vmatpush.msra.mxu0 %v947
    %1090 = vmatpush.msra.mxu0 %v945
    %1091 = vmatpush.msra.mxu0 %v943
    %1092 = vmatpush.msra.mxu0 %v941
    %1093 = vmatpush.msra.mxu0 %v939
    %1094 = vmatpush.msra.mxu0 %v937
    %1095 = vmatpush.msra.mxu0 %v935
    %1096 = vmatmul.f32.gmra.mxu0 %v917
    %v1097 = vpop.f32.mrf.mxu0
    %v1098 = vadd.f32 0.0, %v1097
    %1099 = vmatmul.f32.gmra.mxu0 %v919
    %v1100 = vpop.f32.mrf.mxu0
    %v1101 = vadd.f32 0.0, %v1100
    %1102 = vmatmul.f32.gmra.mxu0 %v921
    %v1103 = vpop.f32.mrf.mxu0
    %v1104 = vadd.f32 0.0, %v1103
    %1105 = vmatmul.f32.gmra.mxu0 %v923
    %v1106 = vpop.f32.mrf.mxu0
    %v1107 = vadd.f32 0.0, %v1106
    %1108 = vmatmul.f32.gmra.mxu0 %v925
    %v1109 = vpop.f32.mrf.mxu0
    %v1110 = vadd.f32 0.0, %v1109
    %1111 = vmatmul.f32.gmra.mxu0 %v927
    %v1112 = vpop.f32.mrf.mxu0
    %v1113 = vadd.f32 0.0, %v1112
    %1114 = vmatmul.f32.gmra.mxu0 %v929
    %v1115 = vpop.f32.mrf.mxu0
    %v1116 = vadd.f32 0.0, %v1115
    %1117 = vmatmul.f32.gmra.mxu0 %v931
    %v1118 = vpop.f32.mrf.mxu0
    %v1119 = vadd.f32 0.0, %v1118
    %1120 = vdwg.mxu0
    %1121 = vmatpush.msra.mxu0 %v997
    %1122 = vmatpush.msra.mxu0 %v995
    %1123 = vmatpush.msra.mxu0 %v993
    %1124 = vmatpush.msra.mxu0 %v991
    %1125 = vmatpush.msra.mxu0 %v989
    %1126 = vmatpush.msra.mxu0 %v987
    %1127 = vmatpush.msra.mxu0 %v985
    %1128 = vmatpush.msra.mxu0 %v983
    %1129 = vmatpush.msra.mxu0 %v981
    %1130 = vmatpush.msra.mxu0 %v979
    %1131 = vmatpush.msra.mxu0 %v977
    %1132 = vmatpush.msra.mxu0 %v975
    %1133 = vmatpush.msra.mxu0 %v973
    %1134 = vmatpush.msra.mxu0 %v971
    %1135 = vmatpush.msra.mxu0 %v969
    %1136 = vmatpush.msra.mxu0 %v967
    %1137 = vmatmul.f32.gmra.mxu0 %v918
    %v1138 = vpop.f32.mrf.mxu0
    %v1139 = vadd.f32 %v1098, %v1138
    %1140 = vmatmul.f32.gmra.mxu0 %v920
    %v1141 = vpop.f32.mrf.mxu0
    %v1142 = vadd.f32 %v1101, %v1141
    %1143 = vmatmul.f32.gmra.mxu0 %v922
    %v1144 = vpop.f32.mrf.mxu0
    %v1145 = vadd.f32 %v1104, %v1144
    %1146 = vmatmul.f32.gmra.mxu0 %v924
    %v1147 = vpop.f32.mrf.mxu0
    %v1148 = vadd.f32 %v1107, %v1147
    %1149 = vmatmul.f32.gmra.mxu0 %v926
    %v1150 = vpop.f32.mrf.mxu0
    %v1151 = vadd.f32 %v1110, %v1150
    %1152 = vmatmul.f32.gmra.mxu0 %v928
    %v1153 = vpop.f32.mrf.mxu0
    %v1154 = vadd.f32 %v1113, %v1153
    %1155 = vmatmul.f32.gmra.mxu0 %v930
    %v1156 = vpop.f32.mrf.mxu0
    %v1157 = vadd.f32 %v1116, %v1156
    %1158 = vmatmul.f32.gmra.mxu0 %v932
    %v1159 = vpop.f32.mrf.mxu0
    %v1160 = vadd.f32 %v1119, %v1159
    %1161 = vdwg.mxu0
    %s1162 = scalar_lea.vmem [#allocation9], 3
    %v1163 = vld [vmem:[%s1162] ss:$8 sm:$0x3]
    %v1165 = vperm.slane %v1163, 0
    %v1166 = vperm.slane %v1163, 1
    %1169 = vmatpush.msra.mxu0 0.0
    %1170 = vmatpush.msra.mxu0 0.0
    %1171 = vmatpush.msra.mxu0 0.0
    %1172 = vmatpush.msra.mxu0 0.0
    %1173 = vmatpush.msra.mxu0 0.0
    %1174 = vmatpush.msra.mxu0 0.0
    %1175 = vmatpush.msra.mxu0 0.0
    %1176 = vmatpush.msra.mxu0 0.0
    %1177 = vmatpush.msra.mxu0 %v1078
    %1178 = vmatpush.msra.mxu0 %v1075
    %1179 = vmatpush.msra.mxu0 %v1072
    %1180 = vmatpush.msra.mxu0 %v1069
    %1181 = vmatpush.msra.mxu0 %v1066
    %1182 = vmatpush.msra.mxu0 %v1063
    %1183 = vmatpush.msra.mxu0 %v1060
    %1184 = vmatpush.msra.mxu0 %v1057
    %1185 = vmatmul.f32.gmra.mxu0 %v145
    %v1186 = vpop.f32.mrf.mxu0
    %v1187 = vadd.f32 %v1165, %v1186
    %1188 = vmatmul.f32.gmra.mxu0 %v148
    %v1189 = vpop.f32.mrf.mxu0
    %v1190 = vadd.f32 %v1165, %v1189
    %1191 = vmatmul.f32.gmra.mxu0 %v151
    %v1192 = vpop.f32.mrf.mxu0
    %v1193 = vadd.f32 %v1165, %v1192
    %1194 = vmatmul.f32.gmra.mxu0 %v154
    %v1195 = vpop.f32.mrf.mxu0
    %v1196 = vadd.f32 %v1165, %v1195
    %1197 = vmatmul.f32.gmra.mxu0 %v157
    %v1198 = vpop.f32.mrf.mxu0
    %v1199 = vadd.f32 %v1165, %v1198
    %1200 = vmatmul.f32.gmra.mxu0 %v160
    %v1201 = vpop.f32.mrf.mxu0
    %v1202 = vadd.f32 %v1165, %v1201
    %1203 = vmatmul.f32.gmra.mxu0 %v163
    %v1204 = vpop.f32.mrf.mxu0
    %v1205 = vadd.f32 %v1165, %v1204
    %1206 = vmatmul.f32.gmra.mxu0 %v166
    %v1207 = vpop.f32.mrf.mxu0
    %v1208 = vadd.f32 %v1165, %v1207
    %1209 = vdwg.mxu0
    %1210 = vmatpush.msra.mxu0 0.0
    %1211 = vmatpush.msra.mxu0 0.0
    %1212 = vmatpush.msra.mxu0 0.0
    %1213 = vmatpush.msra.mxu0 0.0
    %1214 = vmatpush.msra.mxu0 0.0
    %1215 = vmatpush.msra.mxu0 0.0
    %1216 = vmatpush.msra.mxu0 0.0
    %1217 = vmatpush.msra.mxu0 0.0
    %1218 = vmatpush.msra.mxu0 %v1160
    %1219 = vmatpush.msra.mxu0 %v1157
    %1220 = vmatpush.msra.mxu0 %v1154
    %1221 = vmatpush.msra.mxu0 %v1151
    %1222 = vmatpush.msra.mxu0 %v1148
    %1223 = vmatpush.msra.mxu0 %v1145
    %1224 = vmatpush.msra.mxu0 %v1142
    %1225 = vmatpush.msra.mxu0 %v1139
    %1226 = vmatmul.f32.gmra.mxu0 %v145
    %v1227 = vpop.f32.mrf.mxu0
    %v1228 = vadd.f32 %v1166, %v1227
    %1229 = vmatmul.f32.gmra.mxu0 %v148
    %v1230 = vpop.f32.mrf.mxu0
    %v1231 = vadd.f32 %v1166, %v1230
    %1232 = vmatmul.f32.gmra.mxu0 %v151
    %v1233 = vpop.f32.mrf.mxu0
    %v1234 = vadd.f32 %v1166, %v1233
    %1235 = vmatmul.f32.gmra.mxu0 %v154
    %v1236 = vpop.f32.mrf.mxu0
    %v1237 = vadd.f32 %v1166, %v1236
    %1238 = vmatmul.f32.gmra.mxu0 %v157
    %v1239 = vpop.f32.mrf.mxu0
    %v1240 = vadd.f32 %v1166, %v1239
    %1241 = vmatmul.f32.gmra.mxu0 %v160
    %v1242 = vpop.f32.mrf.mxu0
    %v1243 = vadd.f32 %v1166, %v1242
    %1244 = vmatmul.f32.gmra.mxu0 %v163
    %v1245 = vpop.f32.mrf.mxu0
    %v1246 = vadd.f32 %v1166, %v1245
    %1247 = vmatmul.f32.gmra.mxu0 %v166
    %v1248 = vpop.f32.mrf.mxu0
    %v1249 = vadd.f32 %v1166, %v1248
    %1250 = vdwg.mxu0
    %v1251 = vmax.f32 %v1187, 0.0
    %v1252 = vmax.f32 %v1228, 0.0
    %v1253 = vmax.f32 %v1190, 0.0
    %v1254 = vmax.f32 %v1231, 0.0
    %v1255 = vmax.f32 %v1193, 0.0
    %v1256 = vmax.f32 %v1234, 0.0
    %v1257 = vmax.f32 %v1196, 0.0
    %v1258 = vmax.f32 %v1237, 0.0
    %v1259 = vmax.f32 %v1199, 0.0
    %v1260 = vmax.f32 %v1240, 0.0
    %v1261 = vmax.f32 %v1202, 0.0
    %v1262 = vmax.f32 %v1243, 0.0
    %v1263 = vmax.f32 %v1205, 0.0
    %v1264 = vmax.f32 %v1246, 0.0
    %v1265 = vmax.f32 %v1208, 0.0
    %v1266 = vmax.f32 %v1249, 0.0
    %s1267 = scalar_lea.vmem [#allocation6], 1536
    %v1268 = vld [vmem:[%s1267] sm:$0xff]
    %v1269 = vld [vmem:[%s1267 + $0x8] sm:$0xff]
    %v1270 = vld [vmem:[%s1267 + $0x10] sm:$0xff]
    %v1271 = vld [vmem:[%s1267 + $0x18] sm:$0xff]
    %v1272 = vld [vmem:[%s1267 + $0x20] sm:$0xff]
    %v1273 = vld [vmem:[%s1267 + $0x28] sm:$0xff]
    %v1274 = vld [vmem:[%s1267 + $0x30] sm:$0xff]
    %v1275 = vld [vmem:[%s1267 + $0x38] sm:$0xff]
    %v1276 = vld [vmem:[%s1267 + $0x40] sm:$0xff]
    %v1277 = vld [vmem:[%s1267 + $0x48] sm:$0xff]
    %v1278 = vld [vmem:[%s1267 + $0x50] sm:$0xff]
    %v1279 = vld [vmem:[%s1267 + $0x58] sm:$0xff]
    %v1280 = vld [vmem:[%s1267 + $0x60] sm:$0xff]
    %v1281 = vld [vmem:[%s1267 + $0x68] sm:$0xff]
    %v1282 = vld [vmem:[%s1267 + $0x70] sm:$0xff]
    %v1283 = vld [vmem:[%s1267 + $0x78] sm:$0xff]
    %v1284 = vld [vmem:[%s1267 + $0x80] sm:$0xff]
    %v1285 = vld [vmem:[%s1267 + $0x88] sm:$0xff]
    %v1286 = vld [vmem:[%s1267 + $0x90] sm:$0xff]
    %v1287 = vld [vmem:[%s1267 + $0x98] sm:$0xff]
    %v1288 = vld [vmem:[%s1267 + $0xa0] sm:$0xff]
    %v1289 = vld [vmem:[%s1267 + $0xa8] sm:$0xff]
    %v1290 = vld [vmem:[%s1267 + $0xb0] sm:$0xff]
    %v1291 = vld [vmem:[%s1267 + $0xb8] sm:$0xff]
    %v1292 = vld [vmem:[%s1267 + $0xc0] sm:$0xff]
    %v1293 = vld [vmem:[%s1267 + $0xc8] sm:$0xff]
    %v1294 = vld [vmem:[%s1267 + $0xd0] sm:$0xff]
    %v1295 = vld [vmem:[%s1267 + $0xd8] sm:$0xff]
    %v1296 = vld [vmem:[%s1267 + $0xe0] sm:$0xff]
    %v1297 = vld [vmem:[%s1267 + $0xe8] sm:$0xff]
    %v1298 = vld [vmem:[%s1267 + $0xf0] sm:$0xff]
    %v1299 = vld [vmem:[%s1267 + $0xf8] sm:$0xff]
    %v1300 = vld [vmem:[%s1267 + $0x100] sm:$0xff]
    %v1301 = vld [vmem:[%s1267 + $0x108] sm:$0xff]
    %v1302 = vld [vmem:[%s1267 + $0x110] sm:$0xff]
    %v1303 = vld [vmem:[%s1267 + $0x118] sm:$0xff]
    %v1304 = vld [vmem:[%s1267 + $0x120] sm:$0xff]
    %v1305 = vld [vmem:[%s1267 + $0x128] sm:$0xff]
    %v1306 = vld [vmem:[%s1267 + $0x130] sm:$0xff]
    %v1307 = vld [vmem:[%s1267 + $0x138] sm:$0xff]
    %v1308 = vld [vmem:[%s1267 + $0x140] sm:$0xff]
    %v1309 = vld [vmem:[%s1267 + $0x148] sm:$0xff]
    %v1310 = vld [vmem:[%s1267 + $0x150] sm:$0xff]
    %v1311 = vld [vmem:[%s1267 + $0x158] sm:$0xff]
    %v1312 = vld [vmem:[%s1267 + $0x160] sm:$0xff]
    %v1313 = vld [vmem:[%s1267 + $0x168] sm:$0xff]
    %v1314 = vld [vmem:[%s1267 + $0x170] sm:$0xff]
    %v1315 = vld [vmem:[%s1267 + $0x178] sm:$0xff]
    %v1316 = vld [vmem:[%s1267 + $0x180] sm:$0xff]
    %v1317 = vld [vmem:[%s1267 + $0x188] sm:$0xff]
    %v1318 = vld [vmem:[%s1267 + $0x190] sm:$0xff]
    %v1319 = vld [vmem:[%s1267 + $0x198] sm:$0xff]
    %v1320 = vld [vmem:[%s1267 + $0x1a0] sm:$0xff]
    %v1321 = vld [vmem:[%s1267 + $0x1a8] sm:$0xff]
    %v1322 = vld [vmem:[%s1267 + $0x1b0] sm:$0xff]
    %v1323 = vld [vmem:[%s1267 + $0x1b8] sm:$0xff]
    %v1324 = vld [vmem:[%s1267 + $0x1c0] sm:$0xff]
    %v1325 = vld [vmem:[%s1267 + $0x1c8] sm:$0xff]
    %v1326 = vld [vmem:[%s1267 + $0x1d0] sm:$0xff]
    %v1327 = vld [vmem:[%s1267 + $0x1d8] sm:$0xff]
    %v1328 = vld [vmem:[%s1267 + $0x1e0] sm:$0xff]
    %v1329 = vld [vmem:[%s1267 + $0x1e8] sm:$0xff]
    %v1330 = vld [vmem:[%s1267 + $0x1f0] sm:$0xff]
    %v1331 = vld [vmem:[%s1267 + $0x1f8] sm:$0xff]
    %1332 = vmatpush.msra.mxu0 %v1298
    %1333 = vmatpush.msra.mxu0 %v1296
    %1334 = vmatpush.msra.mxu0 %v1294
    %1335 = vmatpush.msra.mxu0 %v1292
    %1336 = vmatpush.msra.mxu0 %v1290
    %1337 = vmatpush.msra.mxu0 %v1288
    %1338 = vmatpush.msra.mxu0 %v1286
    %1339 = vmatpush.msra.mxu0 %v1284
    %1340 = vmatpush.msra.mxu0 %v1282
    %1341 = vmatpush.msra.mxu0 %v1280
    %1342 = vmatpush.msra.mxu0 %v1278
    %1343 = vmatpush.msra.mxu0 %v1276
    %1344 = vmatpush.msra.mxu0 %v1274
    %1345 = vmatpush.msra.mxu0 %v1272
    %1346 = vmatpush.msra.mxu0 %v1270
    %1347 = vmatpush.msra.mxu0 %v1268
    %1348 = vmatmul.f32.gmra.mxu0 %v1251
    %v1349 = vpop.f32.mrf.mxu0
    %v1350 = vadd.f32 0.0, %v1349
    %1351 = vmatmul.f32.gmra.mxu0 %v1253
    %v1352 = vpop.f32.mrf.mxu0
    %v1353 = vadd.f32 0.0, %v1352
    %1354 = vmatmul.f32.gmra.mxu0 %v1255
    %v1355 = vpop.f32.mrf.mxu0
    %v1356 = vadd.f32 0.0, %v1355
    %1357 = vmatmul.f32.gmra.mxu0 %v1257
    %v1358 = vpop.f32.mrf.mxu0
    %v1359 = vadd.f32 0.0, %v1358
    %1360 = vmatmul.f32.gmra.mxu0 %v1259
    %v1361 = vpop.f32.mrf.mxu0
    %v1362 = vadd.f32 0.0, %v1361
    %1363 = vmatmul.f32.gmra.mxu0 %v1261
    %v1364 = vpop.f32.mrf.mxu0
    %v1365 = vadd.f32 0.0, %v1364
    %1366 = vmatmul.f32.gmra.mxu0 %v1263
    %v1367 = vpop.f32.mrf.mxu0
    %v1368 = vadd.f32 0.0, %v1367
    %1369 = vmatmul.f32.gmra.mxu0 %v1265
    %v1370 = vpop.f32.mrf.mxu0
    %v1371 = vadd.f32 0.0, %v1370
    %1372 = vdwg.mxu0
    %1373 = vmatpush.msra.mxu0 %v1330
    %1374 = vmatpush.msra.mxu0 %v1328
    %1375 = vmatpush.msra.mxu0 %v1326
    %1376 = vmatpush.msra.mxu0 %v1324
    %1377 = vmatpush.msra.mxu0 %v1322
    %1378 = vmatpush.msra.mxu0 %v1320
    %1379 = vmatpush.msra.mxu0 %v1318
    %1380 = vmatpush.msra.mxu0 %v1316
    %1381 = vmatpush.msra.mxu0 %v1314
    %1382 = vmatpush.msra.mxu0 %v1312
    %1383 = vmatpush.msra.mxu0 %v1310
    %1384 = vmatpush.msra.mxu0 %v1308
    %1385 = vmatpush.msra.mxu0 %v1306
    %1386 = vmatpush.msra.mxu0 %v1304
    %1387 = vmatpush.msra.mxu0 %v1302
    %1388 = vmatpush.msra.mxu0 %v1300
    %1389 = vmatmul.f32.gmra.mxu0 %v1252
    %v1390 = vpop.f32.mrf.mxu0
    %v1391 = vadd.f32 %v1350, %v1390
    %1392 = vmatmul.f32.gmra.mxu0 %v1254
    %v1393 = vpop.f32.mrf.mxu0
    %v1394 = vadd.f32 %v1353, %v1393
    %1395 = vmatmul.f32.gmra.mxu0 %v1256
    %v1396 = vpop.f32.mrf.mxu0
    %v1397 = vadd.f32 %v1356, %v1396
    %1398 = vmatmul.f32.gmra.mxu0 %v1258
    %v1399 = vpop.f32.mrf.mxu0
    %v1400 = vadd.f32 %v1359, %v1399
    %1401 = vmatmul.f32.gmra.mxu0 %v1260
    %v1402 = vpop.f32.mrf.mxu0
    %v1403 = vadd.f32 %v1362, %v1402
    %1404 = vmatmul.f32.gmra.mxu0 %v1262
    %v1405 = vpop.f32.mrf.mxu0
    %v1406 = vadd.f32 %v1365, %v1405
    %1407 = vmatmul.f32.gmra.mxu0 %v1264
    %v1408 = vpop.f32.mrf.mxu0
    %v1409 = vadd.f32 %v1368, %v1408
    %1410 = vmatmul.f32.gmra.mxu0 %v1266
    %v1411 = vpop.f32.mrf.mxu0
    %v1412 = vadd.f32 %v1371, %v1411
    %1413 = vdwg.mxu0
    %1414 = vmatpush.msra.mxu0 %v1299
    %1415 = vmatpush.msra.mxu0 %v1297
    %1416 = vmatpush.msra.mxu0 %v1295
    %1417 = vmatpush.msra.mxu0 %v1293
    %1418 = vmatpush.msra.mxu0 %v1291
    %1419 = vmatpush.msra.mxu0 %v1289
    %1420 = vmatpush.msra.mxu0 %v1287
    %1421 = vmatpush.msra.mxu0 %v1285
    %1422 = vmatpush.msra.mxu0 %v1283
    %1423 = vmatpush.msra.mxu0 %v1281
    %1424 = vmatpush.msra.mxu0 %v1279
    %1425 = vmatpush.msra.mxu0 %v1277
    %1426 = vmatpush.msra.mxu0 %v1275
    %1427 = vmatpush.msra.mxu0 %v1273
    %1428 = vmatpush.msra.mxu0 %v1271
    %1429 = vmatpush.msra.mxu0 %v1269
    %1430 = vmatmul.f32.gmra.mxu0 %v1251
    %v1431 = vpop.f32.mrf.mxu0
    %v1432 = vadd.f32 0.0, %v1431
    %1433 = vmatmul.f32.gmra.mxu0 %v1253
    %v1434 = vpop.f32.mrf.mxu0
    %v1435 = vadd.f32 0.0, %v1434
    %1436 = vmatmul.f32.gmra.mxu0 %v1255
    %v1437 = vpop.f32.mrf.mxu0
    %v1438 = vadd.f32 0.0, %v1437
    %1439 = vmatmul.f32.gmra.mxu0 %v1257
    %v1440 = vpop.f32.mrf.mxu0
    %v1441 = vadd.f32 0.0, %v1440
    %1442 = vmatmul.f32.gmra.mxu0 %v1259
    %v1443 = vpop.f32.mrf.mxu0
    %v1444 = vadd.f32 0.0, %v1443
    %1445 = vmatmul.f32.gmra.mxu0 %v1261
    %v1446 = vpop.f32.mrf.mxu0
    %v1447 = vadd.f32 0.0, %v1446
    %1448 = vmatmul.f32.gmra.mxu0 %v1263
    %v1449 = vpop.f32.mrf.mxu0
    %v1450 = vadd.f32 0.0, %v1449
    %1451 = vmatmul.f32.gmra.mxu0 %v1265
    %v1452 = vpop.f32.mrf.mxu0
    %v1453 = vadd.f32 0.0, %v1452
    %1454 = vdwg.mxu0
    %1455 = vmatpush.msra.mxu0 %v1331
    %1456 = vmatpush.msra.mxu0 %v1329
    %1457 = vmatpush.msra.mxu0 %v1327
    %1458 = vmatpush.msra.mxu0 %v1325
    %1459 = vmatpush.msra.mxu0 %v1323
    %1460 = vmatpush.msra.mxu0 %v1321
    %1461 = vmatpush.msra.mxu0 %v1319
    %1462 = vmatpush.msra.mxu0 %v1317
    %1463 = vmatpush.msra.mxu0 %v1315
    %1464 = vmatpush.msra.mxu0 %v1313
    %1465 = vmatpush.msra.mxu0 %v1311
    %1466 = vmatpush.msra.mxu0 %v1309
    %1467 = vmatpush.msra.mxu0 %v1307
    %1468 = vmatpush.msra.mxu0 %v1305
    %1469 = vmatpush.msra.mxu0 %v1303
    %1470 = vmatpush.msra.mxu0 %v1301
    %1471 = vmatmul.f32.gmra.mxu0 %v1252
    %v1472 = vpop.f32.mrf.mxu0
    %v1473 = vadd.f32 %v1432, %v1472
    %1474 = vmatmul.f32.gmra.mxu0 %v1254
    %v1475 = vpop.f32.mrf.mxu0
    %v1476 = vadd.f32 %v1435, %v1475
    %1477 = vmatmul.f32.gmra.mxu0 %v1256
    %v1478 = vpop.f32.mrf.mxu0
    %v1479 = vadd.f32 %v1438, %v1478
    %1480 = vmatmul.f32.gmra.mxu0 %v1258
    %v1481 = vpop.f32.mrf.mxu0
    %v1482 = vadd.f32 %v1441, %v1481
    %1483 = vmatmul.f32.gmra.mxu0 %v1260
    %v1484 = vpop.f32.mrf.mxu0
    %v1485 = vadd.f32 %v1444, %v1484
    %1486 = vmatmul.f32.gmra.mxu0 %v1262
    %v1487 = vpop.f32.mrf.mxu0
    %v1488 = vadd.f32 %v1447, %v1487
    %1489 = vmatmul.f32.gmra.mxu0 %v1264
    %v1490 = vpop.f32.mrf.mxu0
    %v1491 = vadd.f32 %v1450, %v1490
    %1492 = vmatmul.f32.gmra.mxu0 %v1266
    %v1493 = vpop.f32.mrf.mxu0
    %v1494 = vadd.f32 %v1453, %v1493
    %1495 = vdwg.mxu0
    %s1496 = scalar_lea.vmem [#allocation9], 4
    %v1497 = vld [vmem:[%s1496] ss:$8 sm:$0x3]
    %v1499 = vperm.slane %v1497, 0
    %v1500 = vperm.slane %v1497, 1
    %1503 = vmatpush.msra.mxu0 0.0
    %1504 = vmatpush.msra.mxu0 0.0
    %1505 = vmatpush.msra.mxu0 0.0
    %1506 = vmatpush.msra.mxu0 0.0
    %1507 = vmatpush.msra.mxu0 0.0
    %1508 = vmatpush.msra.mxu0 0.0
    %1509 = vmatpush.msra.mxu0 0.0
    %1510 = vmatpush.msra.mxu0 0.0
    %1511 = vmatpush.msra.mxu0 %v1412
    %1512 = vmatpush.msra.mxu0 %v1409
    %1513 = vmatpush.msra.mxu0 %v1406
    %1514 = vmatpush.msra.mxu0 %v1403
    %1515 = vmatpush.msra.mxu0 %v1400
    %1516 = vmatpush.msra.mxu0 %v1397
    %1517 = vmatpush.msra.mxu0 %v1394
    %1518 = vmatpush.msra.mxu0 %v1391
    %1519 = vmatmul.f32.gmra.mxu0 %v145
    %v1520 = vpop.f32.mrf.mxu0
    %v1521 = vadd.f32 %v1499, %v1520
    %1522 = vmatmul.f32.gmra.mxu0 %v148
    %v1523 = vpop.f32.mrf.mxu0
    %v1524 = vadd.f32 %v1499, %v1523
    %1525 = vmatmul.f32.gmra.mxu0 %v151
    %v1526 = vpop.f32.mrf.mxu0
    %v1527 = vadd.f32 %v1499, %v1526
    %1528 = vmatmul.f32.gmra.mxu0 %v154
    %v1529 = vpop.f32.mrf.mxu0
    %v1530 = vadd.f32 %v1499, %v1529
    %1531 = vmatmul.f32.gmra.mxu0 %v157
    %v1532 = vpop.f32.mrf.mxu0
    %v1533 = vadd.f32 %v1499, %v1532
    %1534 = vmatmul.f32.gmra.mxu0 %v160
    %v1535 = vpop.f32.mrf.mxu0
    %v1536 = vadd.f32 %v1499, %v1535
    %1537 = vmatmul.f32.gmra.mxu0 %v163
    %v1538 = vpop.f32.mrf.mxu0
    %v1539 = vadd.f32 %v1499, %v1538
    %1540 = vmatmul.f32.gmra.mxu0 %v166
    %v1541 = vpop.f32.mrf.mxu0
    %v1542 = vadd.f32 %v1499, %v1541
    %1543 = vdwg.mxu0
    %1544 = vmatpush.msra.mxu0 0.0
    %1545 = vmatpush.msra.mxu0 0.0
    %1546 = vmatpush.msra.mxu0 0.0
    %1547 = vmatpush.msra.mxu0 0.0
    %1548 = vmatpush.msra.mxu0 0.0
    %1549 = vmatpush.msra.mxu0 0.0
    %1550 = vmatpush.msra.mxu0 0.0
    %1551 = vmatpush.msra.mxu0 0.0
    %1552 = vmatpush.msra.mxu0 %v1494
    %1553 = vmatpush.msra.mxu0 %v1491
    %1554 = vmatpush.msra.mxu0 %v1488
    %1555 = vmatpush.msra.mxu0 %v1485
    %1556 = vmatpush.msra.mxu0 %v1482
    %1557 = vmatpush.msra.mxu0 %v1479
    %1558 = vmatpush.msra.mxu0 %v1476
    %1559 = vmatpush.msra.mxu0 %v1473
    %1560 = vmatmul.f32.gmra.mxu0 %v145
    %v1561 = vpop.f32.mrf.mxu0
    %v1562 = vadd.f32 %v1500, %v1561
    %1563 = vmatmul.f32.gmra.mxu0 %v148
    %v1564 = vpop.f32.mrf.mxu0
    %v1565 = vadd.f32 %v1500, %v1564
    %1566 = vmatmul.f32.gmra.mxu0 %v151
    %v1567 = vpop.f32.mrf.mxu0
    %v1568 = vadd.f32 %v1500, %v1567
    %1569 = vmatmul.f32.gmra.mxu0 %v154
    %v1570 = vpop.f32.mrf.mxu0
    %v1571 = vadd.f32 %v1500, %v1570
    %1572 = vmatmul.f32.gmra.mxu0 %v157
    %v1573 = vpop.f32.mrf.mxu0
    %v1574 = vadd.f32 %v1500, %v1573
    %1575 = vmatmul.f32.gmra.mxu0 %v160
    %v1576 = vpop.f32.mrf.mxu0
    %v1577 = vadd.f32 %v1500, %v1576
    %1578 = vmatmul.f32.gmra.mxu0 %v163
    %v1579 = vpop.f32.mrf.mxu0
    %v1580 = vadd.f32 %v1500, %v1579
    %1581 = vmatmul.f32.gmra.mxu0 %v166
    %v1582 = vpop.f32.mrf.mxu0
    %v1583 = vadd.f32 %v1500, %v1582
    %1584 = vdwg.mxu0
    %v1585 = vmax.f32 %v1521, 0.0
    %v1586 = vmax.f32 %v1562, 0.0
    %v1587 = vmax.f32 %v1524, 0.0
    %v1588 = vmax.f32 %v1565, 0.0
    %v1589 = vmax.f32 %v1527, 0.0
    %v1590 = vmax.f32 %v1568, 0.0
    %v1591 = vmax.f32 %v1530, 0.0
    %v1592 = vmax.f32 %v1571, 0.0
    %v1593 = vmax.f32 %v1533, 0.0
    %v1594 = vmax.f32 %v1574, 0.0
    %v1595 = vmax.f32 %v1536, 0.0
    %v1596 = vmax.f32 %v1577, 0.0
    %v1597 = vmax.f32 %v1539, 0.0
    %v1598 = vmax.f32 %v1580, 0.0
    %v1599 = vmax.f32 %v1542, 0.0
    %v1600 = vmax.f32 %v1583, 0.0
    %v1601 = vld [vmem:[#allocation8] sm:$0xff]
    %v1602 = vld [vmem:[#allocation8 + $0x8] sm:$0xff]
    %v1603 = vld [vmem:[#allocation8 + $0x10] sm:$0xff]
    %v1604 = vld [vmem:[#allocation8 + $0x18] sm:$0xff]
    %v1605 = vld [vmem:[#allocation8 + $0x20] sm:$0xff]
    %v1606 = vld [vmem:[#allocation8 + $0x28] sm:$0xff]
    %v1607 = vld [vmem:[#allocation8 + $0x30] sm:$0xff]
    %v1608 = vld [vmem:[#allocation8 + $0x38] sm:$0xff]
    %v1609 = vld [vmem:[#allocation8 + $0x40] sm:$0xff]
    %v1610 = vld [vmem:[#allocation8 + $0x48] sm:$0xff]
    %v1611 = vld [vmem:[#allocation8 + $0x50] sm:$0xff]
    %v1612 = vld [vmem:[#allocation8 + $0x58] sm:$0xff]
    %v1613 = vld [vmem:[#allocation8 + $0x60] sm:$0xff]
    %v1614 = vld [vmem:[#allocation8 + $0x68] sm:$0xff]
    %v1615 = vld [vmem:[#allocation8 + $0x70] sm:$0xff]
    %v1616 = vld [vmem:[#allocation8 + $0x78] sm:$0xff]
    %v1617 = vld [vmem:[#allocation8 + $0x80] sm:$0xff]
    %v1618 = vld [vmem:[#allocation8 + $0x88] sm:$0xff]
    %v1619 = vld [vmem:[#allocation8 + $0x90] sm:$0xff]
    %v1620 = vld [vmem:[#allocation8 + $0x98] sm:$0xff]
    %v1621 = vld [vmem:[#allocation8 + $0xa0] sm:$0xff]
    %v1622 = vld [vmem:[#allocation8 + $0xa8] sm:$0xff]
    %v1623 = vld [vmem:[#allocation8 + $0xb0] sm:$0xff]
    %v1624 = vld [vmem:[#allocation8 + $0xb8] sm:$0xff]
    %v1625 = vld [vmem:[#allocation8 + $0xc0] sm:$0xff]
    %v1626 = vld [vmem:[#allocation8 + $0xc8] sm:$0xff]
    %v1627 = vld [vmem:[#allocation8 + $0xd0] sm:$0xff]
    %v1628 = vld [vmem:[#allocation8 + $0xd8] sm:$0xff]
    %v1629 = vld [vmem:[#allocation8 + $0xe0] sm:$0xff]
    %v1630 = vld [vmem:[#allocation8 + $0xe8] sm:$0xff]
    %v1631 = vld [vmem:[#allocation8 + $0xf0] sm:$0xff]
    %v1632 = vld [vmem:[#allocation8 + $0xf8] sm:$0xff]
    %1633 = vmatpush.msra.mxu0 %v1616
    %1634 = vmatpush.msra.mxu0 %v1615
    %1635 = vmatpush.msra.mxu0 %v1614
    %1636 = vmatpush.msra.mxu0 %v1613
    %1637 = vmatpush.msra.mxu0 %v1612
    %1638 = vmatpush.msra.mxu0 %v1611
    %1639 = vmatpush.msra.mxu0 %v1610
    %1640 = vmatpush.msra.mxu0 %v1609
    %1641 = vmatpush.msra.mxu0 %v1608
    %1642 = vmatpush.msra.mxu0 %v1607
    %1643 = vmatpush.msra.mxu0 %v1606
    %1644 = vmatpush.msra.mxu0 %v1605
    %1645 = vmatpush.msra.mxu0 %v1604
    %1646 = vmatpush.msra.mxu0 %v1603
    %1647 = vmatpush.msra.mxu0 %v1602
    %1648 = vmatpush.msra.mxu0 %v1601
    %1649 = vmatmul.f32.gmra.mxu0 %v1585
    %v1650 = vpop.f32.mrf.mxu0
    %v1651 = vadd.f32 0.0, %v1650
    %1652 = vmatmul.f32.gmra.mxu0 %v1587
    %v1653 = vpop.f32.mrf.mxu0
    %v1654 = vadd.f32 0.0, %v1653
    %1655 = vmatmul.f32.gmra.mxu0 %v1589
    %v1656 = vpop.f32.mrf.mxu0
    %v1657 = vadd.f32 0.0, %v1656
    %1658 = vmatmul.f32.gmra.mxu0 %v1591
    %v1659 = vpop.f32.mrf.mxu0
    %v1660 = vadd.f32 0.0, %v1659
    %1661 = vmatmul.f32.gmra.mxu0 %v1593
    %v1662 = vpop.f32.mrf.mxu0
    %v1663 = vadd.f32 0.0, %v1662
    %1664 = vmatmul.f32.gmra.mxu0 %v1595
    %v1665 = vpop.f32.mrf.mxu0
    %v1666 = vadd.f32 0.0, %v1665
    %1667 = vmatmul.f32.gmra.mxu0 %v1597
    %v1668 = vpop.f32.mrf.mxu0
    %v1669 = vadd.f32 0.0, %v1668
    %1670 = vmatmul.f32.gmra.mxu0 %v1599
    %v1671 = vpop.f32.mrf.mxu0
    %v1672 = vadd.f32 0.0, %v1671
    %1673 = vdwg.mxu0
    %1674 = vmatpush.msra.mxu0 %v1632
    %1675 = vmatpush.msra.mxu0 %v1631
    %1676 = vmatpush.msra.mxu0 %v1630
    %1677 = vmatpush.msra.mxu0 %v1629
    %1678 = vmatpush.msra.mxu0 %v1628
    %1679 = vmatpush.msra.mxu0 %v1627
    %1680 = vmatpush.msra.mxu0 %v1626
    %1681 = vmatpush.msra.mxu0 %v1625
    %1682 = vmatpush.msra.mxu0 %v1624
    %1683 = vmatpush.msra.mxu0 %v1623
    %1684 = vmatpush.msra.mxu0 %v1622
    %1685 = vmatpush.msra.mxu0 %v1621
    %1686 = vmatpush.msra.mxu0 %v1620
    %1687 = vmatpush.msra.mxu0 %v1619
    %1688 = vmatpush.msra.mxu0 %v1618
    %1689 = vmatpush.msra.mxu0 %v1617
    %1690 = vmatmul.f32.gmra.mxu0 %v1586
    %v1691 = vpop.f32.mrf.mxu0
    %v1692 = vadd.f32 %v1651, %v1691
    %1693 = vmatmul.f32.gmra.mxu0 %v1588
    %v1694 = vpop.f32.mrf.mxu0
    %v1695 = vadd.f32 %v1654, %v1694
    %1696 = vmatmul.f32.gmra.mxu0 %v1590
    %v1697 = vpop.f32.mrf.mxu0
    %v1698 = vadd.f32 %v1657, %v1697
    %1699 = vmatmul.f32.gmra.mxu0 %v1592
    %v1700 = vpop.f32.mrf.mxu0
    %v1701 = vadd.f32 %v1660, %v1700
    %1702 = vmatmul.f32.gmra.mxu0 %v1594
    %v1703 = vpop.f32.mrf.mxu0
    %v1704 = vadd.f32 %v1663, %v1703
    %1705 = vmatmul.f32.gmra.mxu0 %v1596
    %v1706 = vpop.f32.mrf.mxu0
    %v1707 = vadd.f32 %v1666, %v1706
    %1708 = vmatmul.f32.gmra.mxu0 %v1598
    %v1709 = vpop.f32.mrf.mxu0
    %v1710 = vadd.f32 %v1669, %v1709
    %1711 = vmatmul.f32.gmra.mxu0 %v1600
    %v1712 = vpop.f32.mrf.mxu0
    %v1713 = vadd.f32 %v1672, %v1712
    %1714 = vdwg.mxu0
    %v1715 = vld [vmem:[#allocation11] sm:$0x1]
    %v1716 = vperm.slane %v1715, 0
    %1717 = vmatpush.msra.mxu0 0.0
    %1718 = vmatpush.msra.mxu0 0.0
    %1719 = vmatpush.msra.mxu0 0.0
    %1720 = vmatpush.msra.mxu0 0.0
    %1721 = vmatpush.msra.mxu0 0.0
    %1722 = vmatpush.msra.mxu0 0.0
    %1723 = vmatpush.msra.mxu0 0.0
    %1724 = vmatpush.msra.mxu0 0.0
    %1725 = vmatpush.msra.mxu0 %v1713
    %1726 = vmatpush.msra.mxu0 %v1710
    %1727 = vmatpush.msra.mxu0 %v1707
    %1728 = vmatpush.msra.mxu0 %v1704
    %1729 = vmatpush.msra.mxu0 %v1701
    %1730 = vmatpush.msra.mxu0 %v1698
    %1731 = vmatpush.msra.mxu0 %v1695
    %1732 = vmatpush.msra.mxu0 %v1692
    %1733 = vmatmul.f32.gmra.mxu0 %v145
    %v1734 = vpop.f32.mrf.mxu0
    %v1735 = vadd.f32 %v1716, %v1734
    %1736 = vmatmul.f32.gmra.mxu0 %v148
    %v1737 = vpop.f32.mrf.mxu0
    %v1738 = vadd.f32 %v1716, %v1737
    %1739 = vmatmul.f32.gmra.mxu0 %v151
    %v1740 = vpop.f32.mrf.mxu0
    %v1741 = vadd.f32 %v1716, %v1740
    %1742 = vmatmul.f32.gmra.mxu0 %v154
    %v1743 = vpop.f32.mrf.mxu0
    %v1744 = vadd.f32 %v1716, %v1743
    %1745 = vmatmul.f32.gmra.mxu0 %v157
    %v1746 = vpop.f32.mrf.mxu0
    %v1747 = vadd.f32 %v1716, %v1746
    %1748 = vmatmul.f32.gmra.mxu0 %v160
    %v1749 = vpop.f32.mrf.mxu0
    %v1750 = vadd.f32 %v1716, %v1749
    %1751 = vmatmul.f32.gmra.mxu0 %v163
    %v1752 = vpop.f32.mrf.mxu0
    %v1753 = vadd.f32 %v1716, %v1752
    %1754 = vmatmul.f32.gmra.mxu0 %v166
    %v1755 = vpop.f32.mrf.mxu0
    %v1756 = vadd.f32 %v1716, %v1755
    %1757 = vdwg.mxu0
    %v1758 = vmax.f32 %v1735, 0.0
    %v1759 = vmax.f32 %v1738, 0.0
    %v1760 = vmax.f32 %v1741, 0.0
    %v1761 = vmax.f32 %v1744, 0.0
    %v1762 = vmax.f32 %v1747, 0.0
    %v1763 = vmax.f32 %v1750, 0.0
    %v1764 = vmax.f32 %v1753, 0.0
    %v1765 = vmax.f32 %v1756, 0.0
    %s1766 = smul.u32 27, 128
    %s1767 = smul.u32 %s1766, 1
    %s1768 = sshll.u32 %s1767, 4
    %1769 = dma.done [#allocation3], %s1768
    loop: start=0, step=1, limit=26
    $region50: #{gcn32_forward.1} parent=1 // loop_pre_header
      _
    $region51: #{gcn32_forward.1} parent=1 // loop_header
      %s1771 = sphi 0, %s1775
      %p1772 = scmp.ge.s32.totalorder %s1771, 26
      %v1776 = vphi %v1758, %v1888
      %v1777 = vphi %v1759, %v1889
      %v1778 = vphi %v1760, %v1890
      %v1779 = vphi %v1761, %v1891
      %v1780 = vphi %v1762, %v1892
      %v1781 = vphi %v1763, %v1893
      %v1782 = vphi %v1764, %v1894
      %v1783 = vphi %v1765, %v1895
    $region52: #{gcn32_forward.1} parent=1 // loop_header_branch
      %1774 = sbr.rel (%p1772) target = $region56
    $region53: #{gcn32_forward.1} parent=1 // loop_body
      %s1784 = smul.u32 %s1771, 128
      %s1785 = scalar_lea.vmem [#allocation2], %s1784
      %v1786 = vld [vmem:[%s1785] sm:$0xff]
      %v1787 = vld [vmem:[%s1785 + $0x8] sm:$0xff]
      %v1788 = vld [vmem:[%s1785 + $0x10] sm:$0xff]
      %v1789 = vld [vmem:[%s1785 + $0x18] sm:$0xff]
      %v1790 = vld [vmem:[%s1785 + $0x20] sm:$0xff]
      %v1791 = vld [vmem:[%s1785 + $0x28] sm:$0xff]
      %v1792 = vld [vmem:[%s1785 + $0x30] sm:$0xff]
      %v1793 = vld [vmem:[%s1785 + $0x38] sm:$0xff]
      %v1794 = vld [vmem:[%s1785 + $0x40] sm:$0xff]
      %v1795 = vld [vmem:[%s1785 + $0x48] sm:$0xff]
      %v1796 = vld [vmem:[%s1785 + $0x50] sm:$0xff]
      %v1797 = vld [vmem:[%s1785 + $0x58] sm:$0xff]
      %v1798 = vld [vmem:[%s1785 + $0x60] sm:$0xff]
      %v1799 = vld [vmem:[%s1785 + $0x68] sm:$0xff]
      %v1800 = vld [vmem:[%s1785 + $0x70] sm:$0xff]
      %v1801 = vld [vmem:[%s1785 + $0x78] sm:$0xff]
      %s1802 = sadd.s32 %s1771, 1
      %s1803 = scalar_lea.vmem [#allocation11], %s1802
      %v1804 = vld [vmem:[%s1803] sm:$0x1]
      %1805 = vmatpush.msra.mxu0 %v1801
      %1806 = vmatpush.msra.mxu0 %v1800
      %1807 = vmatpush.msra.mxu0 %v1799
      %1808 = vmatpush.msra.mxu0 %v1798
      %1809 = vmatpush.msra.mxu0 %v1797
      %1810 = vmatpush.msra.mxu0 %v1796
      %1811 = vmatpush.msra.mxu0 %v1795
      %1812 = vmatpush.msra.mxu0 %v1794
      %1813 = vmatpush.msra.mxu0 %v1793
      %1814 = vmatpush.msra.mxu0 %v1792
      %1815 = vmatpush.msra.mxu0 %v1791
      %1816 = vmatpush.msra.mxu0 %v1790
      %1817 = vmatpush.msra.mxu0 %v1789
      %1818 = vmatpush.msra.mxu0 %v1788
      %1819 = vmatpush.msra.mxu0 %v1787
      %1820 = vmatpush.msra.mxu0 %v1786
      %1821 = vmatmul.f32.gmra.mxu0 %v1776
      %v1822 = vpop.f32.mrf.mxu0
      %v1823 = vadd.f32 0.0, %v1822
      %1824 = vmatmul.f32.gmra.mxu0 %v1777
      %v1825 = vpop.f32.mrf.mxu0
      %v1826 = vadd.f32 0.0, %v1825
      %1827 = vmatmul.f32.gmra.mxu0 %v1778
      %v1828 = vpop.f32.mrf.mxu0
      %v1829 = vadd.f32 0.0, %v1828
      %1830 = vmatmul.f32.gmra.mxu0 %v1779
      %v1831 = vpop.f32.mrf.mxu0
      %v1832 = vadd.f32 0.0, %v1831
      %1833 = vmatmul.f32.gmra.mxu0 %v1780
      %v1834 = vpop.f32.mrf.mxu0
      %v1835 = vadd.f32 0.0, %v1834
      %1836 = vmatmul.f32.gmra.mxu0 %v1781
      %v1837 = vpop.f32.mrf.mxu0
      %v1838 = vadd.f32 0.0, %v1837
      %1839 = vmatmul.f32.gmra.mxu0 %v1782
      %v1840 = vpop.f32.mrf.mxu0
      %v1841 = vadd.f32 0.0, %v1840
      %1842 = vmatmul.f32.gmra.mxu0 %v1783
      %v1843 = vpop.f32.mrf.mxu0
      %v1844 = vadd.f32 0.0, %v1843
      %1845 = vdwg.mxu0
      %v1846 = vperm.slane %v1804, 0
      %1847 = vmatpush.msra.mxu0 0.0
      %1848 = vmatpush.msra.mxu0 0.0
      %1849 = vmatpush.msra.mxu0 0.0
      %1850 = vmatpush.msra.mxu0 0.0
      %1851 = vmatpush.msra.mxu0 0.0
      %1852 = vmatpush.msra.mxu0 0.0
      %1853 = vmatpush.msra.mxu0 0.0
      %1854 = vmatpush.msra.mxu0 0.0
      %1855 = vmatpush.msra.mxu0 %v1844
      %1856 = vmatpush.msra.mxu0 %v1841
      %1857 = vmatpush.msra.mxu0 %v1838
      %1858 = vmatpush.msra.mxu0 %v1835
      %1859 = vmatpush.msra.mxu0 %v1832
      %1860 = vmatpush.msra.mxu0 %v1829
      %1861 = vmatpush.msra.mxu0 %v1826
      %1862 = vmatpush.msra.mxu0 %v1823
      %1863 = vmatmul.f32.gmra.mxu0 %v145
      %v1864 = vpop.f32.mrf.mxu0
      %v1865 = vadd.f32 %v1846, %v1864
      %1866 = vmatmul.f32.gmra.mxu0 %v148
      %v1867 = vpop.f32.mrf.mxu0
      %v1868 = vadd.f32 %v1846, %v1867
      %1869 = vmatmul.f32.gmra.mxu0 %v151
      %v1870 = vpop.f32.mrf.mxu0
      %v1871 = vadd.f32 %v1846, %v1870
      %1872 = vmatmul.f32.gmra.mxu0 %v154
      %v1873 = vpop.f32.mrf.mxu0
      %v1874 = vadd.f32 %v1846, %v1873
      %1875 = vmatmul.f32.gmra.mxu0 %v157
      %v1876 = vpop.f32.mrf.mxu0
      %v1877 = vadd.f32 %v1846, %v1876
      %1878 = vmatmul.f32.gmra.mxu0 %v160
      %v1879 = vpop.f32.mrf.mxu0
      %v1880 = vadd.f32 %v1846, %v1879
      %1881 = vmatmul.f32.gmra.mxu0 %v163
      %v1882 = vpop.f32.mrf.mxu0
      %v1883 = vadd.f32 %v1846, %v1882
      %1884 = vmatmul.f32.gmra.mxu0 %v166
      %v1885 = vpop.f32.mrf.mxu0
      %v1886 = vadd.f32 %v1846, %v1885
      %1887 = vdwg.mxu0
      %v1888 = vmax.f32 %v1865, 0.0
      %v1889 = vmax.f32 %v1868, 0.0
      %v1890 = vmax.f32 %v1871, 0.0
      %v1891 = vmax.f32 %v1874, 0.0
      %v1892 = vmax.f32 %v1877, 0.0
      %v1893 = vmax.f32 %v1880, 0.0
      %v1894 = vmax.f32 %v1883, 0.0
      %v1895 = vmax.f32 %v1886, 0.0
    $region54: #{gcn32_forward.1} parent=1 // loop_footer
      %s1775 = sadd.s32 1, %s1771
    $region55: #{gcn32_forward.1} parent=1 // loop_footer_branch
      %1770 = sbr.rel target = $region51
    $region56: #{gcn32_forward.1} parent=1 // loop_exit
      _
    %s1896 = scalar_lea.vmem [#allocation2], 3328
    %v1897 = vld [vmem:[%s1896] sm:$0xff]
    %v1898 = vld [vmem:[%s1896 + $0x8] sm:$0xff]
    %v1899 = vld [vmem:[%s1896 + $0x10] sm:$0xff]
    %v1900 = vld [vmem:[%s1896 + $0x18] sm:$0xff]
    %v1901 = vld [vmem:[%s1896 + $0x20] sm:$0xff]
    %v1902 = vld [vmem:[%s1896 + $0x28] sm:$0xff]
    %v1903 = vld [vmem:[%s1896 + $0x30] sm:$0xff]
    %v1904 = vld [vmem:[%s1896 + $0x38] sm:$0xff]
    %v1905 = vld [vmem:[%s1896 + $0x40] sm:$0xff]
    %v1906 = vld [vmem:[%s1896 + $0x48] sm:$0xff]
    %v1907 = vld [vmem:[%s1896 + $0x50] sm:$0xff]
    %v1908 = vld [vmem:[%s1896 + $0x58] sm:$0xff]
    %v1909 = vld [vmem:[%s1896 + $0x60] sm:$0xff]
    %v1910 = vld [vmem:[%s1896 + $0x68] sm:$0xff]
    %v1911 = vld [vmem:[%s1896 + $0x70] sm:$0xff]
    %v1912 = vld [vmem:[%s1896 + $0x78] sm:$0xff]
    %v1913 = vld [vmem:[#allocation11 + $0x1b] sm:$0x1]
    %v1914 = vperm.slane %v1913, 0
    %1915 = vmatpush.msra.mxu0 %v1912
    %1916 = vmatpush.msra.mxu0 %v1911
    %1917 = vmatpush.msra.mxu0 %v1910
    %1918 = vmatpush.msra.mxu0 %v1909
    %1919 = vmatpush.msra.mxu0 %v1908
    %1920 = vmatpush.msra.mxu0 %v1907
    %1921 = vmatpush.msra.mxu0 %v1906
    %1922 = vmatpush.msra.mxu0 %v1905
    %1923 = vmatpush.msra.mxu0 %v1904
    %1924 = vmatpush.msra.mxu0 %v1903
    %1925 = vmatpush.msra.mxu0 %v1902
    %1926 = vmatpush.msra.mxu0 %v1901
    %1927 = vmatpush.msra.mxu0 %v1900
    %1928 = vmatpush.msra.mxu0 %v1899
    %1929 = vmatpush.msra.mxu0 %v1898
    %1930 = vmatpush.msra.mxu0 %v1897
    %1931 = vmatmul.f32.gmra.mxu0 %v1776
    %v1932 = vpop.f32.mrf.mxu0
    %v1933 = vadd.f32 %v1914, %v1932
    %1934 = vmatmul.f32.gmra.mxu0 %v1777
    %v1935 = vpop.f32.mrf.mxu0
    %v1936 = vadd.f32 %v1914, %v1935
    %1937 = vmatmul.f32.gmra.mxu0 %v1778
    %v1938 = vpop.f32.mrf.mxu0
    %v1939 = vadd.f32 %v1914, %v1938
    %1940 = vmatmul.f32.gmra.mxu0 %v1779
    %v1941 = vpop.f32.mrf.mxu0
    %v1942 = vadd.f32 %v1914, %v1941
    %1943 = vmatmul.f32.gmra.mxu0 %v1780
    %v1944 = vpop.f32.mrf.mxu0
    %v1945 = vadd.f32 %v1914, %v1944
    %1946 = vmatmul.f32.gmra.mxu0 %v1781
    %v1947 = vpop.f32.mrf.mxu0
    %v1948 = vadd.f32 %v1914, %v1947
    %1949 = vmatmul.f32.gmra.mxu0 %v1782
    %v1950 = vpop.f32.mrf.mxu0
    %v1951 = vadd.f32 %v1914, %v1950
    %1952 = vmatmul.f32.gmra.mxu0 %v1783
    %v1953 = vpop.f32.mrf.mxu0
    %v1954 = vadd.f32 %v1914, %v1953
    %1955 = vdwg.mxu0
    %1956 = vst [vmem:[%s7] sm:$0xff] %v1933
    %1957 = vst [vmem:[%s7 + $0x8] sm:$0xff] %v1936
    %1958 = vst [vmem:[%s7 + $0x10] sm:$0xff] %v1939
    %1959 = vst [vmem:[%s7 + $0x18] sm:$0xff] %v1942
    %1960 = vst [vmem:[%s7 + $0x20] sm:$0xff] %v1945
    %1961 = vst [vmem:[%s7 + $0x28] sm:$0xff] %v1948
    %1962 = vst [vmem:[%s7 + $0x30] sm:$0xff] %v1951
    %1963 = vst [vmem:[%s7 + $0x38] sm:$0xff] %v1954
    // Predicated region
    $region57: #{gcn32_forward.1} parent=1 // pred_check
      _
    $region58: #{gcn32_forward.1} parent=1 // pred_check_branch
      %1965 = sbr.rel (0) target = $region60
    $region59: #{gcn32_forward.1} parent=1 // pred_region
      _
    $region60: #{gcn32_forward.1} parent=1 // pred_fallthru
      _
    // Predicated region
    $region61: #{gcn32_forward.1} parent=1 // pred_check
      _
    $region62: #{gcn32_forward.1} parent=1 // pred_check_branch
      %1967 = sbr.rel (0) target = $region64
    $region63: #{gcn32_forward.1} parent=1 // pred_region
      _
    $region64: #{gcn32_forward.1} parent=1 // pred_fallthru
      _
    %1968 = vsyncpa [#allocation5], 1
    %1969 = vsyncpa [#allocation7], 1
    %1970 = vsyncpa [#allocation10], 1
  %1971 = vsyncmov [#allocation3]
  %s1972 = vpop.sfrf %1971
  %p1973 = scmp.eq.s32.totalorder %s1972, 0
  %p1974 = pneg %p1973
  %1976 = shalt.err (%p1974)

</llo_original>
